<compile_context>
chip_gen: v6e
topology: v6e:2x2x1
jax: 0.10.0
libtpu: 0.0.40
codegen_flags: <defaults>
</compile_context>

<pallas_src>
import functools

import jax
import jax.numpy as jnp
from jax import lax
from jax.experimental import pallas as pl
from jax.experimental.pallas import tpu as pltpu


def _round_up(x, m):
    return ((x + m - 1) // m) * m


def simple_model_i_kernel(
    action_ref,   # SMEM (A, 3) f32
    xadj_ref,     # VMEM (NP + N, W) f32: rows 0:N = xv, rows NP:NP+N = adj
    wpack_ref,    # VMEM (Fp + 9E + 7, E) f32: [w1; w2; w3a; w3b; w4; p1; p2; biases]
    hpack_ref,    # VMEM (2, 4E) f32: [0|w5 w5 w5 ; b4|b5 b5 b5]
    out_ref,      # VMEM (A, 1) f32
    *, T, N, NP, Fp, E, A,
):
    relu = lambda v: jnp.maximum(v, 0.0)
    dot = functools.partial(jnp.dot, preferred_element_type=jnp.float32)

    # Static row offsets into wpack (all multiples of 8 -> free sublane slices).
    o_w2, o_w3a, o_w3b = Fp, Fp + E, Fp + 2 * E
    o_w4, o_p1, o_p2 = Fp + 3 * E, Fp + 4 * E, Fp + 8 * E
    o_b = Fp + 9 * E                      # b1, b2, b3, pb1, pb2, p3, pb3@lane0

    xv = xadj_ref[0:N, 0:Fp]              # (N, Fp)   (cols F:Fp are zeros)
    adj = xadj_ref[NP:NP + N, 0:N]        # (N, N)

    b1 = wpack_ref[o_b + 0:o_b + 1, :]
    b2 = wpack_ref[o_b + 1:o_b + 2, :]
    b3 = wpack_ref[o_b + 2:o_b + 3, :]
    pb1 = wpack_ref[o_b + 3:o_b + 4, :]
    pb2 = wpack_ref[o_b + 4:o_b + 5, :]
    p3w = wpack_ref[o_b + 5:o_b + 6, :]
    pb3 = wpack_ref[o_b + 6:o_b + 7, 0:1]

    # q1: hv = relu(xv @ w1 + b1)
    hv = relu(dot(xv, wpack_ref[0:Fp, :]) + b1)                         # (N, E)

    # Hoisted loop-invariant half of q3 (incl. its bias) and the b2 broadcast.
    hv_w3a_b3 = dot(hv, wpack_ref[o_w3a:o_w3a + E, :]) + b3             # (N, E)
    b2n = jnp.broadcast_to(b2, (N, E))

    w2 = wpack_ref[o_w2:o_w2 + E, :]
    w3b = wpack_ref[o_w3b:o_w3b + E, :]

    # Message-passing loop (static unroll, T small).
    mu = hv
    for _ in range(T):
        m = dot(adj, mu)                           # t==0: mu == hv
        mu1 = relu(dot(m, w2) + b2n)               # q2
        mu = relu(hv_w3a_b3 + dot(mu1, w3b))       # q3 (concat as block matmuls)

    mu_mean = jnp.mean(mu, axis=0, keepdims=True)  # (1, E)

    # q4: plain (1,E)@(E,E) matmul; its bias + relu happen in the fused head.
    q4 = dot(mu_mean, wpack_ref[o_w4:o_w4 + E, :])                      # (1, E)
    q4_wide = jnp.concatenate(
        [q4, jnp.zeros((1, 3 * E), jnp.float32)], axis=1)               # (1, 4E)

    # Lane-coded action rows; lanes < E are don't-care (w5row is zero there).
    lane = lax.broadcasted_iota(jnp.int32, (1, 4 * E), 1)
    rows = [jnp.where(lane < 2 * E, action_ref[a, 0],
            jnp.where(lane < 3 * E, action_ref[a, 1], action_ref[a, 2]))
            for a in range(A)]
    a_mat = rows[0] if A == 1 else jnp.concatenate(rows, axis=0)        # (A, 4E)

    w5row = hpack_ref[0:1, :]      # [0 | w5 w5 w5]
    b45 = hpack_ref[1:2, :]        # [b4 | b5 b5 b5]
    # relu(head[a]) == cat(q4(mu_mean), q5(a0), q5(a1), q5(a2)) for action a.
    head = relu(q4_wide + a_mat * w5row + b45)                          # (A, 4E)

    # p1: single (A,4E)@(4E,E) matmul; p2: (A,E)@(E,E).
    q_ = relu(dot(head, wpack_ref[o_p1:o_p1 + 4 * E, :]) + pb1)         # (A, E)
    q_ = relu(dot(q_, wpack_ref[o_p2:o_p2 + E, :]) + pb2)               # (A, E)
    # p3: VPU multiply + lane reduce (kept off the MXU critical chain).
    out_ref[...] = jnp.sum(q_ * p3w, axis=-1, keepdims=True) + pb3      # (A, 1)


def pack_params(params, *, F, E):
    """One-time host-side packing of all per-layer parameters into 2 arrays."""
    assert E % 8 == 0, "embed_dim assumed a multiple of 8 (module default is 64)"
    Fp = _round_up(F, 8)
    w1 = params["w1"]
    if Fp != F:   # zero-pad w1 rows; xv columns get matching zero-padding per call
        w1 = jnp.concatenate([w1, jnp.zeros((Fp - F, E), jnp.float32)], axis=0)
    pb3_row = jnp.zeros((1, E), jnp.float32).at[0, 0].set(params["pb3"][0, 0])
    wpack = jnp.concatenate(
        [w1, params["w2"], params["w3a"], params["w3b"], params["w4"],
         params["p1"], params["p2"],
         params["b1"], params["b2"], params["b3"],
         params["pb1"], params["pb2"], params["p3"], pb3_row],
        axis=0)                                                    # (Fp + 9E + 7, E)
    w5row = jnp.concatenate([jnp.zeros((1, E), jnp.float32),
                             jnp.tile(params["w5"], (1, 3))], axis=1)
    b45 = jnp.concatenate([params["b4"], jnp.tile(params["b5"], (1, 3))], axis=1)
    hpack = jnp.concatenate([w5row, b45], axis=0)                  # (2, 4E)
    return wpack, hpack, Fp


def simple_model_i(packed, xv, action, adj, *, T, E):
    """action (3,) -> (1,)  [original forward];  action (A,3) -> (A,1)."""
    wpack, hpack, Fp = packed
    N, F = xv.shape
    NP = _round_up(N, 8)
    W = max(Fp, N)

    single = action.ndim == 1
    action2 = (action.reshape(1, 3) if single else action).astype(jnp.float32)
    A = action2.shape[0]

    # Stack xv and adj into one input (one DMA); the kernel slices them apart.
    xv_p = jnp.pad(xv, ((0, NP - N), (0, W - F)))
    adj_p = jnp.pad(adj, ((0, 0), (0, W - N)))
    xadj = jnp.concatenate([xv_p, adj_p], axis=0)                  # (NP + N, W)

    flops = 2 * (N * Fp * E + N * E * E
                 + T * (N * N * E + 2 * N * E * E)
                 + E * E + A * (4 * E * E + E * E + E))
    bytes_accessed = 4 * int(action2.size + xadj.size + wpack.size
                             + hpack.size + A)

    vmem = pl.BlockSpec(memory_space=pltpu.MemorySpace.VMEM)
    smem = pl.BlockSpec(memory_space=pltpu.MemorySpace.SMEM)
    out = pl.pallas_call(
        functools.partial(simple_model_i_kernel,
                          T=T, N=N, NP=NP, Fp=Fp, E=E, A=A),
        out_shape=jax.ShapeDtypeStruct((A, 1), jnp.float32),
        in_specs=[smem, vmem, vmem, vmem],
        out_specs=vmem,
        cost_estimate=pl.CostEstimate(flops=flops, transcendentals=0,
                                      bytes_accessed=bytes_accessed),
    )(action2, xadj, wpack, hpack)
    return out.reshape(1) if single else out


def init_params(key, node_feature_size, embed_dim):
    """Deterministic PyTorch-style init: U(-1/sqrt(fan_in), 1/sqrt(fan_in))."""
    def linear(k, in_dim, out_dim):
        kw, kb = jax.random.split(k)
        bound = 1.0 / (in_dim ** 0.5)
        w = jax.random.uniform(kw, (out_dim, in_dim), jnp.float32, -bound, bound)
        b = jax.random.uniform(kb, (out_dim,), jnp.float32, -bound, bound)
        return w.T, b.reshape(1, out_dim)   # (in, out), (1, out)

    E = embed_dim
    keys = jax.random.split(key, 8)
    w1, b1 = linear(keys[0], node_feature_size, E)
    w2, b2 = linear(keys[1], E, E)
    w3, b3 = linear(keys[2], 2 * E, E)
    w4, b4 = linear(keys[3], E, E)
    w5, b5 = linear(keys[4], 1, E)
    p1, pb1 = linear(keys[5], 4 * E, E)
    p2, pb2 = linear(keys[6], E, E)
    p3, pb3 = linear(keys[7], E, 1)
    return dict(
        w1=w1, b1=b1, w2=w2, b2=b2,
        w3a=w3[:E], w3b=w3[E:], b3=b3,
        w4=w4, b4=b4, w5=w5, b5=b5,
        p1=p1, pb1=pb1, p2=p2, pb2=pb2,
        p3=p3.reshape(1, E), pb3=pb3.reshape(1, 1),
    )


def reference(params, xv, action, adj, T=3):
    """Pure-JAX port of the PyTorch forward, for correctness checking."""
    relu = lambda v: jnp.maximum(v, 0.0)
    hv = relu(xv @ params["w1"] + params["b1"])
    w3 = jnp.concatenate([params["w3a"], params["w3b"]], axis=0)
    mu = hv
    for t in range(T):
        m = adj @ (hv if t == 0 else mu)
        mu1 = relu(m @ params["w2"] + params["b2"])
        mu = relu(jnp.concatenate([hv, mu1], axis=-1) @ w3 + params["b3"])
    mu_mean = mu.mean(axis=0, keepdims=True)
    h4 = relu(mu_mean @ params["w4"] + params["b4"])
    q5 = relu(action.reshape(-1, 1) @ params["w5"] + params["b5"]).reshape(1, -1)
    q_cat = jnp.concatenate([h4, q5], axis=-1)
    q_ = relu(q_cat @ params["p1"] + params["pb1"])
    q_ = relu(q_ @ params["p2"] + params["pb2"])
    q = q_ @ params["p3"].T + params["pb3"]
    return q.reshape(1)


if __name__ == "__main__":
    # nodes, node_feature_size, embed_dim (module default), message-passing rounds
    N, F, E, T = 8, 16, 64, 3
    key = jax.random.PRNGKey(0)
    k_param, k_xv, k_adj, k_act, k_actb = jax.random.split(key, 5)

    params = init_params(k_param, F, E)
    xv = jax.random.normal(k_xv, (N, F), jnp.float32)
    adj = (jax.random.uniform(k_adj, (N, N)) < 0.4).astype(jnp.float32)
    adj = jnp.maximum(adj, adj.T)       # symmetric 0/1 adjacency
    action = jax.random.normal(k_act, (3,), jnp.float32)

    packed = pack_params(params, F=F, E=E)

    # Original forward semantics: single action (3,) -> (1,).
    q = simple_model_i(packed, xv, action, adj, T=T, E=E)
    jax.block_until_ready(q)
    q_ref = reference(params, xv, action, adj, T=T)
    assert q.shape == (1,)
    assert jnp.allclose(q, q_ref, atol=1e-4, rtol=1e-5), (q, q_ref)

    # Batched candidate actions (A,3) -> (A,1): message passing shared across A.
    actions = jax.random.normal(k_actb, (4, 3), jnp.float32)
    qb = simple_model_i(packed, xv, actions, adj, T=T, E=E)
    jax.block_until_ready(qb)
    qb_ref = jnp.stack([reference(params, xv, actions[a], adj, T=T)
                        for a in range(actions.shape[0])])
    assert qb.shape == (4, 1)
    assert jnp.allclose(qb, qb_ref, atol=1e-4, rtol=1e-5), (qb, qb_ref)

    print("KERNEL_OK")
</pallas_src>

<mosaic_0001>
module attributes {stable_mosaic.version = 11 : i64} {
  func.func @simple_model_i_kernel(%arg0: memref<1x3xf32, #tpu.memory_space<smem>>, %arg1: memref<16x16xf32, #tpu.memory_space<vmem>>, %arg2: memref<599x64xf32, #tpu.memory_space<vmem>>, %arg3: memref<2x256xf32, #tpu.memory_space<vmem>>, %arg4: memref<1x1xf32, #tpu.memory_space<vmem>>) attributes {dimension_semantics = [], scalar_prefetch = 0 : i64, scratch_operands = 0 : i64, tpu.core_type = #tpu.core_type<tc>} {
    %c0 = arith.constant 0 : index
    %c0_0 = arith.constant 0 : index
    %0 = vector.load %arg1[%c0, %c0_0] : memref<16x16xf32, #tpu.memory_space<vmem>>, vector<8x16xf32>
    %c8 = arith.constant 8 : index
    %c0_1 = arith.constant 0 : index
    %1 = vector.load %arg1[%c8, %c0_1] : memref<16x16xf32, #tpu.memory_space<vmem>>, vector<8x8xf32>
    %c592 = arith.constant 592 : index
    %c0_2 = arith.constant 0 : index
    %2 = vector.load %arg2[%c592, %c0_2] : memref<599x64xf32, #tpu.memory_space<vmem>>, vector<1x64xf32>
    %c593 = arith.constant 593 : index
    %c0_3 = arith.constant 0 : index
    %3 = vector.load %arg2[%c593, %c0_3] : memref<599x64xf32, #tpu.memory_space<vmem>>, vector<1x64xf32>
    %c594 = arith.constant 594 : index
    %c0_4 = arith.constant 0 : index
    %4 = vector.load %arg2[%c594, %c0_4] : memref<599x64xf32, #tpu.memory_space<vmem>>, vector<1x64xf32>
    %c595 = arith.constant 595 : index
    %c0_5 = arith.constant 0 : index
    %5 = vector.load %arg2[%c595, %c0_5] : memref<599x64xf32, #tpu.memory_space<vmem>>, vector<1x64xf32>
    %c596 = arith.constant 596 : index
    %c0_6 = arith.constant 0 : index
    %6 = vector.load %arg2[%c596, %c0_6] : memref<599x64xf32, #tpu.memory_space<vmem>>, vector<1x64xf32>
    %c597 = arith.constant 597 : index
    %c0_7 = arith.constant 0 : index
    %7 = vector.load %arg2[%c597, %c0_7] : memref<599x64xf32, #tpu.memory_space<vmem>>, vector<1x64xf32>
    %c598 = arith.constant 598 : index
    %c0_8 = arith.constant 0 : index
    %8 = vector.load %arg2[%c598, %c0_8] : memref<599x64xf32, #tpu.memory_space<vmem>>, vector<1x1xf32>
    %c0_9 = arith.constant 0 : index
    %c0_10 = arith.constant 0 : index
    %9 = vector.load %arg2[%c0_9, %c0_10] : memref<599x64xf32, #tpu.memory_space<vmem>>, vector<16x64xf32>
    %cst = arith.constant dense<0.000000e+00> : vector<8x64xf32>
    %10 = tpu.matmul %0, %9, %cst {dimension_numbers = #tpu.dot_dimension_numbers<[1], [0], [0], [1], [0, 0, 1, 1], [], []>} : vector<8x16xf32>, vector<16x64xf32>, vector<8x64xf32> -> vector<8x64xf32>
    %11 = vector.broadcast %2 : vector<1x64xf32> to vector<8x64xf32>
    %12 = arith.addf %10, %11 : vector<8x64xf32>
    %cst_11 = arith.constant 0.000000e+00 : f32
    %13 = vector.broadcast %cst_11 : f32 to vector<8x64xf32>
    %14 = arith.maximumf %12, %13 : vector<8x64xf32>
    %c80 = arith.constant 80 : index
    %c0_12 = arith.constant 0 : index
    %15 = vector.load %arg2[%c80, %c0_12] : memref<599x64xf32, #tpu.memory_space<vmem>>, vector<64x64xf32>
    %cst_13 = arith.constant dense<0.000000e+00> : vector<8x64xf32>
    %16 = tpu.matmul %14, %15, %cst_13 {dimension_numbers = #tpu.dot_dimension_numbers<[1], [0], [0], [1], [0, 0, 1, 1], [], []>} : vector<8x64xf32>, vector<64x64xf32>, vector<8x64xf32> -> vector<8x64xf32>
    %17 = vector.broadcast %4 : vector<1x64xf32> to vector<8x64xf32>
    %18 = arith.addf %16, %17 : vector<8x64xf32>
    %19 = vector.shape_cast %3 : vector<1x64xf32> to vector<1x64xf32>
    %20 = vector.broadcast %19 : vector<1x64xf32> to vector<8x64xf32>
    %c16 = arith.constant 16 : index
    %c0_14 = arith.constant 0 : index
    %21 = vector.load %arg2[%c16, %c0_14] : memref<599x64xf32, #tpu.memory_space<vmem>>, vector<64x64xf32>
    %c144 = arith.constant 144 : index
    %c0_15 = arith.constant 0 : index
    %22 = vector.load %arg2[%c144, %c0_15] : memref<599x64xf32, #tpu.memory_space<vmem>>, vector<64x64xf32>
    %cst_16 = arith.constant dense<0.000000e+00> : vector<8x64xf32>
    %23 = tpu.matmul %1, %14, %cst_16 {dimension_numbers = #tpu.dot_dimension_numbers<[1], [0], [0], [1], [0, 0, 1, 1], [], []>} : vector<8x8xf32>, vector<8x64xf32>, vector<8x64xf32> -> vector<8x64xf32>
    %cst_17 = arith.constant dense<0.000000e+00> : vector<8x64xf32>
    %24 = tpu.matmul %23, %21, %cst_17 {dimension_numbers = #tpu.dot_dimension_numbers<[1], [0], [0], [1], [0, 0, 1, 1], [], []>} : vector<8x64xf32>, vector<64x64xf32>, vector<8x64xf32> -> vector<8x64xf32>
    %25 = arith.addf %24, %20 : vector<8x64xf32>
    %cst_18 = arith.constant 0.000000e+00 : f32
    %26 = vector.broadcast %cst_18 : f32 to vector<8x64xf32>
    %27 = arith.maximumf %25, %26 : vector<8x64xf32>
    %cst_19 = arith.constant dense<0.000000e+00> : vector<8x64xf32>
    %28 = tpu.matmul %27, %22, %cst_19 {dimension_numbers = #tpu.dot_dimension_numbers<[1], [0], [0], [1], [0, 0, 1, 1], [], []>} : vector<8x64xf32>, vector<64x64xf32>, vector<8x64xf32> -> vector<8x64xf32>
    %29 = arith.addf %18, %28 : vector<8x64xf32>
    %cst_20 = arith.constant 0.000000e+00 : f32
    %30 = vector.broadcast %cst_20 : f32 to vector<8x64xf32>
    %31 = arith.maximumf %29, %30 : vector<8x64xf32>
    %cst_21 = arith.constant dense<0.000000e+00> : vector<8x64xf32>
    %32 = tpu.matmul %1, %31, %cst_21 {dimension_numbers = #tpu.dot_dimension_numbers<[1], [0], [0], [1], [0, 0, 1, 1], [], []>} : vector<8x8xf32>, vector<8x64xf32>, vector<8x64xf32> -> vector<8x64xf32>
    %cst_22 = arith.constant dense<0.000000e+00> : vector<8x64xf32>
    %33 = tpu.matmul %32, %21, %cst_22 {dimension_numbers = #tpu.dot_dimension_numbers<[1], [0], [0], [1], [0, 0, 1, 1], [], []>} : vector<8x64xf32>, vector<64x64xf32>, vector<8x64xf32> -> vector<8x64xf32>
    %34 = arith.addf %33, %20 : vector<8x64xf32>
    %cst_23 = arith.constant 0.000000e+00 : f32
    %35 = vector.broadcast %cst_23 : f32 to vector<8x64xf32>
    %36 = arith.maximumf %34, %35 : vector<8x64xf32>
    %cst_24 = arith.constant dense<0.000000e+00> : vector<8x64xf32>
    %37 = tpu.matmul %36, %22, %cst_24 {dimension_numbers = #tpu.dot_dimension_numbers<[1], [0], [0], [1], [0, 0, 1, 1], [], []>} : vector<8x64xf32>, vector<64x64xf32>, vector<8x64xf32> -> vector<8x64xf32>
    %38 = arith.addf %18, %37 : vector<8x64xf32>
    %cst_25 = arith.constant 0.000000e+00 : f32
    %39 = vector.broadcast %cst_25 : f32 to vector<8x64xf32>
    %40 = arith.maximumf %38, %39 : vector<8x64xf32>
    %cst_26 = arith.constant dense<0.000000e+00> : vector<8x64xf32>
    %41 = tpu.matmul %1, %40, %cst_26 {dimension_numbers = #tpu.dot_dimension_numbers<[1], [0], [0], [1], [0, 0, 1, 1], [], []>} : vector<8x8xf32>, vector<8x64xf32>, vector<8x64xf32> -> vector<8x64xf32>
    %cst_27 = arith.constant dense<0.000000e+00> : vector<8x64xf32>
    %42 = tpu.matmul %41, %21, %cst_27 {dimension_numbers = #tpu.dot_dimension_numbers<[1], [0], [0], [1], [0, 0, 1, 1], [], []>} : vector<8x64xf32>, vector<64x64xf32>, vector<8x64xf32> -> vector<8x64xf32>
    %43 = arith.addf %42, %20 : vector<8x64xf32>
    %cst_28 = arith.constant 0.000000e+00 : f32
    %44 = vector.broadcast %cst_28 : f32 to vector<8x64xf32>
    %45 = arith.maximumf %43, %44 : vector<8x64xf32>
    %cst_29 = arith.constant dense<0.000000e+00> : vector<8x64xf32>
    %46 = tpu.matmul %45, %22, %cst_29 {dimension_numbers = #tpu.dot_dimension_numbers<[1], [0], [0], [1], [0, 0, 1, 1], [], []>} : vector<8x64xf32>, vector<64x64xf32>, vector<8x64xf32> -> vector<8x64xf32>
    %47 = arith.addf %18, %46 : vector<8x64xf32>
    %cst_30 = arith.constant 0.000000e+00 : f32
    %48 = vector.broadcast %cst_30 : f32 to vector<8x64xf32>
    %49 = arith.maximumf %47, %48 : vector<8x64xf32>
    %cst_31 = arith.constant dense<0.000000e+00> : vector<64xf32>
    %50 = vector.multi_reduction <add>, %49, %cst_31 [0] : vector<8x64xf32> to vector<64xf32>
    %51 = vector.shape_cast %50 : vector<64xf32> to vector<1x64xf32>
    %cst_32 = arith.constant 8.000000e+00 : f32
    %52 = vector.broadcast %cst_32 : f32 to vector<1x64xf32>
    %53 = arith.divf %51, %52 : vector<1x64xf32>
    %c208 = arith.constant 208 : index
    %c0_33 = arith.constant 0 : index
    %54 = vector.load %arg2[%c208, %c0_33] : memref<599x64xf32, #tpu.memory_space<vmem>>, vector<64x64xf32>
    %cst_34 = arith.constant dense<0.000000e+00> : vector<1x64xf32>
    %55 = tpu.matmul %53, %54, %cst_34 {dimension_numbers = #tpu.dot_dimension_numbers<[1], [0], [0], [1], [0, 0, 1, 1], [], []>} : vector<1x64xf32>, vector<64x64xf32>, vector<1x64xf32> -> vector<1x64xf32>
    %cst_35 = arith.constant 0.000000e+00 : f32
    %56 = vector.broadcast %cst_35 : f32 to vector<1x192xf32>
    %57 = tpu.concatenate %55, %56 in 1 : vector<1x64xf32>, vector<1x192xf32> -> vector<1x256xf32>
    %58 = tpu.iota {dimensions = array<i32: 1>} : vector<1x256xi32>
    %c128_i32 = arith.constant 128 : i32
    %59 = vector.broadcast %c128_i32 : i32 to vector<1x256xi32>
    %60 = arith.cmpi slt, %58, %59 : vector<1x256xi32>
    %c0_36 = arith.constant 0 : index
    %c0_37 = arith.constant 0 : index
    %61 = memref.load %arg0[%c0_36, %c0_37] : memref<1x3xf32, #tpu.memory_space<smem>>
    %c192_i32 = arith.constant 192 : i32
    %62 = vector.broadcast %c192_i32 : i32 to vector<1x256xi32>
    %63 = arith.cmpi slt, %58, %62 : vector<1x256xi32>
    %c0_38 = arith.constant 0 : index
    %c1 = arith.constant 1 : index
    %64 = memref.load %arg0[%c0_38, %c1] : memref<1x3xf32, #tpu.memory_space<smem>>
    %c0_39 = arith.constant 0 : index
    %c2 = arith.constant 2 : index
    %65 = memref.load %arg0[%c0_39, %c2] : memref<1x3xf32, #tpu.memory_space<smem>>
    %66 = vector.broadcast %64 : f32 to vector<1x256xf32>
    %67 = vector.broadcast %65 : f32 to vector<1x256xf32>
    %68 = arith.select %63, %66, %67 : vector<1x256xi1>, vector<1x256xf32>
    %69 = vector.broadcast %61 : f32 to vector<1x256xf32>
    %70 = arith.select %60, %69, %68 : vector<1x256xi1>, vector<1x256xf32>
    %c0_40 = arith.constant 0 : index
    %c0_41 = arith.constant 0 : index
    %71 = vector.load %arg3[%c0_40, %c0_41] : memref<2x256xf32, #tpu.memory_space<vmem>>, vector<1x256xf32>
    %c1_42 = arith.constant 1 : index
    %c0_43 = arith.constant 0 : index
    %72 = vector.load %arg3[%c1_42, %c0_43] : memref<2x256xf32, #tpu.memory_space<vmem>>, vector<1x256xf32>
    %73 = arith.mulf %70, %71 : vector<1x256xf32>
    %74 = arith.addf %57, %73 : vector<1x256xf32>
    %75 = arith.addf %74, %72 : vector<1x256xf32>
    %cst_44 = arith.constant 0.000000e+00 : f32
    %76 = vector.broadcast %cst_44 : f32 to vector<1x256xf32>
    %77 = arith.maximumf %75, %76 : vector<1x256xf32>
    %c272 = arith.constant 272 : index
    %c0_45 = arith.constant 0 : index
    %78 = vector.load %arg2[%c272, %c0_45] : memref<599x64xf32, #tpu.memory_space<vmem>>, vector<256x64xf32>
    %cst_46 = arith.constant dense<0.000000e+00> : vector<1x64xf32>
    %79 = tpu.matmul %77, %78, %cst_46 {dimension_numbers = #tpu.dot_dimension_numbers<[1], [0], [0], [1], [0, 0, 1, 1], [], []>} : vector<1x256xf32>, vector<256x64xf32>, vector<1x64xf32> -> vector<1x64xf32>
    %80 = arith.addf %79, %5 : vector<1x64xf32>
    %cst_47 = arith.constant 0.000000e+00 : f32
    %81 = vector.broadcast %cst_47 : f32 to vector<1x64xf32>
    %82 = arith.maximumf %80, %81 : vector<1x64xf32>
    %c528 = arith.constant 528 : index
    %c0_48 = arith.constant 0 : index
    %83 = vector.load %arg2[%c528, %c0_48] : memref<599x64xf32, #tpu.memory_space<vmem>>, vector<64x64xf32>
    %cst_49 = arith.constant dense<0.000000e+00> : vector<1x64xf32>
    %84 = tpu.matmul %82, %83, %cst_49 {dimension_numbers = #tpu.dot_dimension_numbers<[1], [0], [0], [1], [0, 0, 1, 1], [], []>} : vector<1x64xf32>, vector<64x64xf32>, vector<1x64xf32> -> vector<1x64xf32>
    %85 = arith.addf %84, %6 : vector<1x64xf32>
    %cst_50 = arith.constant 0.000000e+00 : f32
    %86 = vector.broadcast %cst_50 : f32 to vector<1x64xf32>
    %87 = arith.maximumf %85, %86 : vector<1x64xf32>
    %88 = arith.mulf %87, %7 : vector<1x64xf32>
    %cst_51 = arith.constant dense<0.000000e+00> : vector<1xf32>
    %89 = vector.multi_reduction <add>, %88, %cst_51 [1] : vector<1x64xf32> to vector<1xf32>
    %90 = vector.shape_cast %89 : vector<1xf32> to vector<1x1xf32>
    %91 = arith.addf %90, %8 : vector<1x1xf32>
    %c0_52 = arith.constant 0 : index
    %c0_53 = arith.constant 0 : index
    %92 = vector.load %arg4[%c0_52, %c0_53] : memref<1x1xf32, #tpu.memory_space<vmem>>, vector<1x1xf32>
    tpu.vector_store %arg4[%c0_52, %c0_53], %91 {strides = array<i32>} : memref<1x1xf32, #tpu.memory_space<vmem>>, vector<1x1xf32>,
    return
  }
}

</mosaic_0001>

<llo_original>
// kernel: tpu_custom_call.1
$region0: #{tpu_custom_call.1}
  #allocation0 [shape = 'u32[]', space=smem, size = 0x4, offset = 0x4, fixed_abs, tag = 'smem constant byte address 0x4 - core index']
  #allocation1 [shape = 'u32[144,128]{1,0:T(1,128)}', space=vmem, size = 0x12000, scoped, tag = 'internal scratch']
  %s0 = inlined_call_operand.vmem [shape: f32[1,3], index: 0, kind: input, shape index: {}]
  %s1 = inlined_call_operand.vmem [shape: f32[16,16], index: 1, kind: input, shape index: {}]
  %s2 = inlined_call_operand.vmem [shape: f32[599,64], index: 2, kind: input, shape index: {}]
  %s3 = inlined_call_operand.vmem [shape: f32[2,256], index: 3, kind: input, shape index: {}]
  %s4 = inlined_call_operand.hbm [shape: f32[1,1], index: 4, kind: output, shape index: {}]
  %s5 = sld [smem:[#allocation0]]
  $region30: #{tpu_custom_call.1} parent=0
    _
  %s7 = ssub.s32 1, %s5
  %s8 = scalar_select 0, %s7, %s5
  $region1: #{tpu_custom_call.1} parent=0
    #allocation2 [shape = 'u8[512]{0}', space=smem, size = 0x200, scoped, tag = 'input window, operand 0, single buffered']
    #allocation3 [shape = 's32[1]{0}', space=sflag, size = 0x4, scoped, tag = 'scoped memory for tpu_custom_call.1']
    #allocation4 [shape = 's32[1]{0}', space=sflag, size = 0x4, scoped, tag = 'scoped memory for tpu_custom_call.1']
    #allocation5 [shape = 'u8[512]{0}', space=vmem, size = 0x400, scoped, tag = 'output window, operand 0, single buffered']
    %9 = vsyncpa [#allocation4], 0
    %10 = vsyncpa [#allocation3], 0
    // Predicated region
    $region2: #{tpu_custom_call.1} parent=1 // pred_check
      _
    $region3: #{tpu_custom_call.1} parent=1 // pred_check_branch
      %12 = sbr.rel (0) target = $region5
    $region4: #{tpu_custom_call.1} parent=1 // pred_region
      %s14 = ssub.s32 16, 16
      %15 = vsyncadd [#allocation4], %s14
      %s17 = sshll.u32 %s0, 4
      %s18 = int_to_ptr.vmem [resolvable:$true] %s17
      %20 = dma.vmem_to_smem %s18, 16, [#allocation2], [#allocation4]
    $region5: #{tpu_custom_call.1} parent=1 // pred_fallthru
      _
    // Predicated region
    $region6: #{tpu_custom_call.1} parent=1 // pred_check
      _
    $region7: #{tpu_custom_call.1} parent=1 // pred_check_branch
      %22 = sbr.rel (0) target = $region9
    $region8: #{tpu_custom_call.1} parent=1 // pred_region
      _
    $region9: #{tpu_custom_call.1} parent=1 // pred_fallthru
      _
    // Predicated region
    $region10: #{tpu_custom_call.1} parent=1 // pred_check
      _
    $region11: #{tpu_custom_call.1} parent=1 // pred_check_branch
      %24 = sbr.rel (0) target = $region13
    $region12: #{tpu_custom_call.1} parent=1 // pred_region
      _
    $region13: #{tpu_custom_call.1} parent=1 // pred_fallthru
      _
    // Predicated region
    $region14: #{tpu_custom_call.1} parent=1 // pred_check
      _
    $region15: #{tpu_custom_call.1} parent=1 // pred_check_branch
      %26 = sbr.rel (0) target = $region17
    $region16: #{tpu_custom_call.1} parent=1 // pred_region
      _
    $region17: #{tpu_custom_call.1} parent=1 // pred_fallthru
      _
    // Predicated region
    $region18: #{tpu_custom_call.1} parent=1 // pred_check
      _
    $region19: #{tpu_custom_call.1} parent=1 // pred_check_branch
      %28 = sbr.rel (0) target = $region21
    $region20: #{tpu_custom_call.1} parent=1 // pred_region
      %29 = dma.done [#allocation4], 16
    $region21: #{tpu_custom_call.1} parent=1 // pred_fallthru
      _
    %30 = sfence
    %v31 = vld [vmem:[%s1] sm:$0xff]
    %v32 = vld [vmem:[%s1 + $0x8] sm:$0xff]
    %v33 = vld [vmem:[%s2 + $0x250] sm:$0x1]
    %v34 = vld [vmem:[%s2 + $0x251] sm:$0x1]
    %v35 = vld [vmem:[%s2 + $0x252] sm:$0x1]
    %v36 = vld [vmem:[%s2 + $0x253] sm:$0x1]
    %v37 = vld [vmem:[%s2 + $0x254] sm:$0x1]
    %v38 = vld [vmem:[%s2 + $0x255] sm:$0x1]
    %v39 = vld [vmem:[%s2 + $0x256] sm:$0x1]
    %v40 = vld [vmem:[%s2] sm:$0xff]
    %v41 = vld [vmem:[%s2 + $0x8] sm:$0xff]
    %v42 = vlaneseq
    %v43 = vshrl.u32 %v42, 7
    %v44 = vsub.s32 0, %v43
    %v45 = vrot.slane %v33, %v44
    %vm46 = vcmask 130048
    %v48 = vsel %vm46, %v31, 0
    %50 = vmatprep.subr.mxu0 0.0
    %51 = vmatpush1.msra.mxu0 0.0
    %52 = vmatprep.subr.mxu0 0.0
    %53 = vmatpush1.msra.mxu0 0.0
    %54 = vmatprep.subr.mxu0 0.0
    %55 = vmatpush1.msra.mxu0 0.0
    %56 = vmatprep.subr.mxu0 0.0
    %57 = vmatpush1.msra.mxu0 0.0
    %58 = vmatprep.subr.mxu0 0.0
    %59 = vmatpush1.msra.mxu0 0.0
    %60 = vmatprep.subr.mxu0 0.0
    %61 = vmatpush1.msra.mxu0 0.0
    %62 = vmatprep.subr.mxu0 0.0
    %63 = vmatpush1.msra.mxu0 0.0
    %64 = vmatprep.subr.mxu0 0.0
    %65 = vmatpush1.msra.mxu0 0.0
    %66 = vmatprep.subr.mxu0 0.0
    %67 = vmatpush1.msra.mxu0 0.0
    %68 = vmatprep.subr.mxu0 0.0
    %69 = vmatpush1.msra.mxu0 0.0
    %70 = vmatprep.subr.mxu0 0.0
    %71 = vmatpush1.msra.mxu0 0.0
    %72 = vmatprep.subr.mxu0 0.0
    %73 = vmatpush1.msra.mxu0 0.0
    %74 = vmatprep.subr.mxu0 0.0
    %75 = vmatpush1.msra.mxu0 0.0
    %76 = vmatprep.subr.mxu0 0.0
    %77 = vmatpush1.msra.mxu0 0.0
    %78 = vmatprep.subr.mxu0 0.0
    %79 = vmatpush1.msra.mxu0 %v41
    %80 = vmatprep.subr.mxu0 0.0
    %81 = vmatpush1.msra.mxu0 %v40
    %82 = vmatprep.subr.mxu0 0.0
    %83 = vmatpush2.msra.mxu0 0.0
    %84 = vmatprep.subr.mxu0 0.0
    %85 = vmatpush2.msra.mxu0 0.0
    %86 = vmatprep.subr.mxu0 0.0
    %87 = vmatpush2.msra.mxu0 0.0
    %88 = vmatprep.subr.mxu0 0.0
    %89 = vmatpush2.msra.mxu0 0.0
    %90 = vmatprep.subr.mxu0 0.0
    %91 = vmatpush2.msra.mxu0 0.0
    %92 = vmatprep.subr.mxu0 0.0
    %93 = vmatpush2.msra.mxu0 0.0
    %94 = vmatprep.subr.mxu0 0.0
    %95 = vmatpush2.msra.mxu0 0.0
    %96 = vmatprep.subr.mxu0 0.0
    %97 = vmatpush2.msra.mxu0 0.0
    %98 = vmatprep.subr.mxu0 0.0
    %99 = vmatpush2.msra.mxu0 0.0
    %100 = vmatprep.subr.mxu0 0.0
    %101 = vmatpush2.msra.mxu0 0.0
    %102 = vmatprep.subr.mxu0 0.0
    %103 = vmatpush2.msra.mxu0 0.0
    %104 = vmatprep.subr.mxu0 0.0
    %105 = vmatpush2.msra.mxu0 0.0
    %106 = vmatprep.subr.mxu0 0.0
    %107 = vmatpush2.msra.mxu0 0.0
    %108 = vmatprep.subr.mxu0 0.0
    %109 = vmatpush2.msra.mxu0 0.0
    %110 = vmatprep.subr.mxu0 0.0
    %111 = vmatpush2.msra.mxu0 0.0
    %112 = vmatprep.subr.mxu0 0.0
    %113 = vmatpush2.msra.mxu0 0.0
    %114 = vmatprep.mubr.f32.mxu0 0.0
    %115 = vmatmul.mubr.f32.gmra.mxu0 %v48
    %v116 = vpop.f32.mrf.mxu0
    %v117 = vadd.f32 %v45, %v116
    %v118 = vpop.f32.mrf.mxu0
    %119 = vdwg.mxu0
    %v120 = vmax.f32 %v117, 0.0
    %v121 = vld [vmem:[%s2 + $0x50] sm:$0xff]
    %v122 = vld [vmem:[%s2 + $0x58] sm:$0xff]
    %v123 = vld [vmem:[%s2 + $0x60] sm:$0xff]
    %v124 = vld [vmem:[%s2 + $0x68] sm:$0xff]
    %v125 = vld [vmem:[%s2 + $0x70] sm:$0xff]
    %v126 = vld [vmem:[%s2 + $0x78] sm:$0xff]
    %v127 = vld [vmem:[%s2 + $0x80] sm:$0xff]
    %v128 = vld [vmem:[%s2 + $0x88] sm:$0xff]
    %v129 = vlaneseq
    %v130 = vshrl.u32 %v129, 7
    %v131 = vsub.s32 0, %v130
    %v132 = vrot.slane %v35, %v131
    %vm133 = vcmask 523264
    %v135 = vsel %vm133, %v120, 0
    %137 = vmatprep.subr.mxu0 0.0
    %138 = vmatpush1.msra.mxu0 0.0
    %139 = vmatprep.subr.mxu0 0.0
    %140 = vmatpush1.msra.mxu0 0.0
    %141 = vmatprep.subr.mxu0 0.0
    %142 = vmatpush1.msra.mxu0 0.0
    %143 = vmatprep.subr.mxu0 0.0
    %144 = vmatpush1.msra.mxu0 0.0
    %145 = vmatprep.subr.mxu0 0.0
    %146 = vmatpush1.msra.mxu0 0.0
    %147 = vmatprep.subr.mxu0 0.0
    %148 = vmatpush1.msra.mxu0 0.0
    %149 = vmatprep.subr.mxu0 0.0
    %150 = vmatpush1.msra.mxu0 0.0
    %151 = vmatprep.subr.mxu0 0.0
    %152 = vmatpush1.msra.mxu0 0.0
    %153 = vmatprep.subr.mxu0 0.0
    %154 = vmatpush1.msra.mxu0 %v128
    %155 = vmatprep.subr.mxu0 0.0
    %156 = vmatpush1.msra.mxu0 %v127
    %157 = vmatprep.subr.mxu0 0.0
    %158 = vmatpush1.msra.mxu0 %v126
    %159 = vmatprep.subr.mxu0 0.0
    %160 = vmatpush1.msra.mxu0 %v125
    %161 = vmatprep.subr.mxu0 0.0
    %162 = vmatpush1.msra.mxu0 %v124
    %163 = vmatprep.subr.mxu0 0.0
    %164 = vmatpush1.msra.mxu0 %v123
    %165 = vmatprep.subr.mxu0 0.0
    %166 = vmatpush1.msra.mxu0 %v122
    %167 = vmatprep.subr.mxu0 0.0
    %168 = vmatpush1.msra.mxu0 %v121
    %169 = vmatprep.subr.mxu0 0.0
    %170 = vmatpush2.msra.mxu0 0.0
    %171 = vmatprep.subr.mxu0 0.0
    %172 = vmatpush2.msra.mxu0 0.0
    %173 = vmatprep.subr.mxu0 0.0
    %174 = vmatpush2.msra.mxu0 0.0
    %175 = vmatprep.subr.mxu0 0.0
    %176 = vmatpush2.msra.mxu0 0.0
    %177 = vmatprep.subr.mxu0 0.0
    %178 = vmatpush2.msra.mxu0 0.0
    %179 = vmatprep.subr.mxu0 0.0
    %180 = vmatpush2.msra.mxu0 0.0
    %181 = vmatprep.subr.mxu0 0.0
    %182 = vmatpush2.msra.mxu0 0.0
    %183 = vmatprep.subr.mxu0 0.0
    %184 = vmatpush2.msra.mxu0 0.0
    %185 = vmatprep.subr.mxu0 0.0
    %186 = vmatpush2.msra.mxu0 0.0
    %187 = vmatprep.subr.mxu0 0.0
    %188 = vmatpush2.msra.mxu0 0.0
    %189 = vmatprep.subr.mxu0 0.0
    %190 = vmatpush2.msra.mxu0 0.0
    %191 = vmatprep.subr.mxu0 0.0
    %192 = vmatpush2.msra.mxu0 0.0
    %193 = vmatprep.subr.mxu0 0.0
    %194 = vmatpush2.msra.mxu0 0.0
    %195 = vmatprep.subr.mxu0 0.0
    %196 = vmatpush2.msra.mxu0 0.0
    %197 = vmatprep.subr.mxu0 0.0
    %198 = vmatpush2.msra.mxu0 0.0
    %199 = vmatprep.subr.mxu0 0.0
    %200 = vmatpush2.msra.mxu0 0.0
    %201 = vmatprep.mubr.f32.mxu0 0.0
    %202 = vmatmul.mubr.f32.gmra.mxu0 %v135
    %v203 = vpop.f32.mrf.mxu0
    %v204 = vadd.f32 %v132, %v203
    %v205 = vpop.f32.mrf.mxu0
    %206 = vdwg.mxu0
    %v207 = vlaneseq
    %v208 = vshrl.u32 %v207, 7
    %v209 = vsub.s32 0, %v208
    %v210 = vrot.slane %v34, %v209
    %v211 = vld [vmem:[%s2 + $0x10] sm:$0xff]
    %v212 = vld [vmem:[%s2 + $0x18] sm:$0xff]
    %v213 = vld [vmem:[%s2 + $0x20] sm:$0xff]
    %v214 = vld [vmem:[%s2 + $0x28] sm:$0xff]
    %v215 = vld [vmem:[%s2 + $0x30] sm:$0xff]
    %v216 = vld [vmem:[%s2 + $0x38] sm:$0xff]
    %v217 = vld [vmem:[%s2 + $0x40] sm:$0xff]
    %v218 = vld [vmem:[%s2 + $0x48] sm:$0xff]
    %v219 = vld [vmem:[%s2 + $0x90] sm:$0xff]
    %v220 = vld [vmem:[%s2 + $0x98] sm:$0xff]
    %v221 = vld [vmem:[%s2 + $0xa0] sm:$0xff]
    %v222 = vld [vmem:[%s2 + $0xa8] sm:$0xff]
    %v223 = vld [vmem:[%s2 + $0xb0] sm:$0xff]
    %v224 = vld [vmem:[%s2 + $0xb8] sm:$0xff]
    %v225 = vld [vmem:[%s2 + $0xc0] sm:$0xff]
    %v226 = vld [vmem:[%s2 + $0xc8] sm:$0xff]
    %vm227 = vcmask 64512
    %v229 = vsel %vm227, %v32, 0
    %231 = vmatprep.subr.mxu0 0.0
    %232 = vmatpush1.msra.mxu0 0.0
    %233 = vmatprep.subr.mxu0 0.0
    %234 = vmatpush1.msra.mxu0 0.0
    %235 = vmatprep.subr.mxu0 0.0
    %236 = vmatpush1.msra.mxu0 0.0
    %237 = vmatprep.subr.mxu0 0.0
    %238 = vmatpush1.msra.mxu0 0.0
    %239 = vmatprep.subr.mxu0 0.0
    %240 = vmatpush1.msra.mxu0 0.0
    %241 = vmatprep.subr.mxu0 0.0
    %242 = vmatpush1.msra.mxu0 0.0
    %243 = vmatprep.subr.mxu0 0.0
    %244 = vmatpush1.msra.mxu0 0.0
    %245 = vmatprep.subr.mxu0 0.0
    %246 = vmatpush1.msra.mxu0 0.0
    %247 = vmatprep.subr.mxu0 0.0
    %248 = vmatpush1.msra.mxu0 0.0
    %249 = vmatprep.subr.mxu0 0.0
    %250 = vmatpush1.msra.mxu0 0.0
    %251 = vmatprep.subr.mxu0 0.0
    %252 = vmatpush1.msra.mxu0 0.0
    %253 = vmatprep.subr.mxu0 0.0
    %254 = vmatpush1.msra.mxu0 0.0
    %255 = vmatprep.subr.mxu0 0.0
    %256 = vmatpush1.msra.mxu0 0.0
    %257 = vmatprep.subr.mxu0 0.0
    %258 = vmatpush1.msra.mxu0 0.0
    %259 = vmatprep.subr.mxu0 0.0
    %260 = vmatpush1.msra.mxu0 0.0
    %261 = vmatprep.subr.mxu0 0.0
    %262 = vmatpush1.msra.mxu0 %v120
    %263 = vmatprep.subr.mxu0 0.0
    %264 = vmatpush2.msra.mxu0 0.0
    %265 = vmatprep.subr.mxu0 0.0
    %266 = vmatpush2.msra.mxu0 0.0
    %267 = vmatprep.subr.mxu0 0.0
    %268 = vmatpush2.msra.mxu0 0.0
    %269 = vmatprep.subr.mxu0 0.0
    %270 = vmatpush2.msra.mxu0 0.0
    %271 = vmatprep.subr.mxu0 0.0
    %272 = vmatpush2.msra.mxu0 0.0
    %273 = vmatprep.subr.mxu0 0.0
    %274 = vmatpush2.msra.mxu0 0.0
    %275 = vmatprep.subr.mxu0 0.0
    %276 = vmatpush2.msra.mxu0 0.0
    %277 = vmatprep.subr.mxu0 0.0
    %278 = vmatpush2.msra.mxu0 0.0
    %279 = vmatprep.subr.mxu0 0.0
    %280 = vmatpush2.msra.mxu0 0.0
    %281 = vmatprep.subr.mxu0 0.0
    %282 = vmatpush2.msra.mxu0 0.0
    %283 = vmatprep.subr.mxu0 0.0
    %284 = vmatpush2.msra.mxu0 0.0
    %285 = vmatprep.subr.mxu0 0.0
    %286 = vmatpush2.msra.mxu0 0.0
    %287 = vmatprep.subr.mxu0 0.0
    %288 = vmatpush2.msra.mxu0 0.0
    %289 = vmatprep.subr.mxu0 0.0
    %290 = vmatpush2.msra.mxu0 0.0
    %291 = vmatprep.subr.mxu0 0.0
    %292 = vmatpush2.msra.mxu0 0.0
    %293 = vmatprep.subr.mxu0 0.0
    %294 = vmatpush2.msra.mxu0 0.0
    %295 = vmatprep.mubr.f32.mxu0 0.0
    %296 = vmatmul.mubr.f32.gmra.mxu0 %v229
    %v297 = vpop.f32.mrf.mxu0
    %v298 = vadd.f32 0.0, %v297
    %v299 = vpop.f32.mrf.mxu0
    %300 = vdwg.mxu0
    %v302 = vsel %vm133, %v298, 0
    %304 = vmatprep.subr.mxu0 0.0
    %305 = vmatpush1.msra.mxu0 0.0
    %306 = vmatprep.subr.mxu0 0.0
    %307 = vmatpush1.msra.mxu0 0.0
    %308 = vmatprep.subr.mxu0 0.0
    %309 = vmatpush1.msra.mxu0 0.0
    %310 = vmatprep.subr.mxu0 0.0
    %311 = vmatpush1.msra.mxu0 0.0
    %312 = vmatprep.subr.mxu0 0.0
    %313 = vmatpush1.msra.mxu0 0.0
    %314 = vmatprep.subr.mxu0 0.0
    %315 = vmatpush1.msra.mxu0 0.0
    %316 = vmatprep.subr.mxu0 0.0
    %317 = vmatpush1.msra.mxu0 0.0
    %318 = vmatprep.subr.mxu0 0.0
    %319 = vmatpush1.msra.mxu0 0.0
    %320 = vmatprep.subr.mxu0 0.0
    %321 = vmatpush1.msra.mxu0 %v218
    %322 = vmatprep.subr.mxu0 0.0
    %323 = vmatpush1.msra.mxu0 %v217
    %324 = vmatprep.subr.mxu0 0.0
    %325 = vmatpush1.msra.mxu0 %v216
    %326 = vmatprep.subr.mxu0 0.0
    %327 = vmatpush1.msra.mxu0 %v215
    %328 = vmatprep.subr.mxu0 0.0
    %329 = vmatpush1.msra.mxu0 %v214
    %330 = vmatprep.subr.mxu0 0.0
    %331 = vmatpush1.msra.mxu0 %v213
    %332 = vmatprep.subr.mxu0 0.0
    %333 = vmatpush1.msra.mxu0 %v212
    %334 = vmatprep.subr.mxu0 0.0
    %335 = vmatpush1.msra.mxu0 %v211
    %336 = vmatprep.subr.mxu0 0.0
    %337 = vmatpush2.msra.mxu0 0.0
    %338 = vmatprep.subr.mxu0 0.0
    %339 = vmatpush2.msra.mxu0 0.0
    %340 = vmatprep.subr.mxu0 0.0
    %341 = vmatpush2.msra.mxu0 0.0
    %342 = vmatprep.subr.mxu0 0.0
    %343 = vmatpush2.msra.mxu0 0.0
    %344 = vmatprep.subr.mxu0 0.0
    %345 = vmatpush2.msra.mxu0 0.0
    %346 = vmatprep.subr.mxu0 0.0
    %347 = vmatpush2.msra.mxu0 0.0
    %348 = vmatprep.subr.mxu0 0.0
    %349 = vmatpush2.msra.mxu0 0.0
    %350 = vmatprep.subr.mxu0 0.0
    %351 = vmatpush2.msra.mxu0 0.0
    %352 = vmatprep.subr.mxu0 0.0
    %353 = vmatpush2.msra.mxu0 0.0
    %354 = vmatprep.subr.mxu0 0.0
    %355 = vmatpush2.msra.mxu0 0.0
    %356 = vmatprep.subr.mxu0 0.0
    %357 = vmatpush2.msra.mxu0 0.0
    %358 = vmatprep.subr.mxu0 0.0
    %359 = vmatpush2.msra.mxu0 0.0
    %360 = vmatprep.subr.mxu0 0.0
    %361 = vmatpush2.msra.mxu0 0.0
    %362 = vmatprep.subr.mxu0 0.0
    %363 = vmatpush2.msra.mxu0 0.0
    %364 = vmatprep.subr.mxu0 0.0
    %365 = vmatpush2.msra.mxu0 0.0
    %366 = vmatprep.subr.mxu0 0.0
    %367 = vmatpush2.msra.mxu0 0.0
    %368 = vmatprep.mubr.f32.mxu0 0.0
    %369 = vmatmul.mubr.f32.gmra.mxu0 %v302
    %v370 = vpop.f32.mrf.mxu0
    %v371 = vadd.f32 %v210, %v370
    %v372 = vpop.f32.mrf.mxu0
    %373 = vdwg.mxu0
    %v374 = vmax.f32 %v371, 0.0
    %v376 = vsel %vm133, %v374, 0
    %378 = vmatprep.subr.mxu0 0.0
    %379 = vmatpush1.msra.mxu0 0.0
    %380 = vmatprep.subr.mxu0 0.0
    %381 = vmatpush1.msra.mxu0 0.0
    %382 = vmatprep.subr.mxu0 0.0
    %383 = vmatpush1.msra.mxu0 0.0
    %384 = vmatprep.subr.mxu0 0.0
    %385 = vmatpush1.msra.mxu0 0.0
    %386 = vmatprep.subr.mxu0 0.0
    %387 = vmatpush1.msra.mxu0 0.0
    %388 = vmatprep.subr.mxu0 0.0
    %389 = vmatpush1.msra.mxu0 0.0
    %390 = vmatprep.subr.mxu0 0.0
    %391 = vmatpush1.msra.mxu0 0.0
    %392 = vmatprep.subr.mxu0 0.0
    %393 = vmatpush1.msra.mxu0 0.0
    %394 = vmatprep.subr.mxu0 0.0
    %395 = vmatpush1.msra.mxu0 %v226
    %396 = vmatprep.subr.mxu0 0.0
    %397 = vmatpush1.msra.mxu0 %v225
    %398 = vmatprep.subr.mxu0 0.0
    %399 = vmatpush1.msra.mxu0 %v224
    %400 = vmatprep.subr.mxu0 0.0
    %401 = vmatpush1.msra.mxu0 %v223
    %402 = vmatprep.subr.mxu0 0.0
    %403 = vmatpush1.msra.mxu0 %v222
    %404 = vmatprep.subr.mxu0 0.0
    %405 = vmatpush1.msra.mxu0 %v221
    %406 = vmatprep.subr.mxu0 0.0
    %407 = vmatpush1.msra.mxu0 %v220
    %408 = vmatprep.subr.mxu0 0.0
    %409 = vmatpush1.msra.mxu0 %v219
    %410 = vmatprep.subr.mxu0 0.0
    %411 = vmatpush2.msra.mxu0 0.0
    %412 = vmatprep.subr.mxu0 0.0
    %413 = vmatpush2.msra.mxu0 0.0
    %414 = vmatprep.subr.mxu0 0.0
    %415 = vmatpush2.msra.mxu0 0.0
    %416 = vmatprep.subr.mxu0 0.0
    %417 = vmatpush2.msra.mxu0 0.0
    %418 = vmatprep.subr.mxu0 0.0
    %419 = vmatpush2.msra.mxu0 0.0
    %420 = vmatprep.subr.mxu0 0.0
    %421 = vmatpush2.msra.mxu0 0.0
    %422 = vmatprep.subr.mxu0 0.0
    %423 = vmatpush2.msra.mxu0 0.0
    %424 = vmatprep.subr.mxu0 0.0
    %425 = vmatpush2.msra.mxu0 0.0
    %426 = vmatprep.subr.mxu0 0.0
    %427 = vmatpush2.msra.mxu0 0.0
    %428 = vmatprep.subr.mxu0 0.0
    %429 = vmatpush2.msra.mxu0 0.0
    %430 = vmatprep.subr.mxu0 0.0
    %431 = vmatpush2.msra.mxu0 0.0
    %432 = vmatprep.subr.mxu0 0.0
    %433 = vmatpush2.msra.mxu0 0.0
    %434 = vmatprep.subr.mxu0 0.0
    %435 = vmatpush2.msra.mxu0 0.0
    %436 = vmatprep.subr.mxu0 0.0
    %437 = vmatpush2.msra.mxu0 0.0
    %438 = vmatprep.subr.mxu0 0.0
    %439 = vmatpush2.msra.mxu0 0.0
    %440 = vmatprep.subr.mxu0 0.0
    %441 = vmatpush2.msra.mxu0 0.0
    %442 = vmatprep.mubr.f32.mxu0 0.0
    %443 = vmatmul.mubr.f32.gmra.mxu0 %v376
    %v444 = vpop.f32.mrf.mxu0
    %v445 = vadd.f32 0.0, %v444
    %v446 = vpop.f32.mrf.mxu0
    %447 = vdwg.mxu0
    %v448 = vadd.f32 %v204, %v445
    %v449 = vmax.f32 %v448, 0.0
    %450 = vmatprep.subr.mxu0 0.0
    %451 = vmatpush1.msra.mxu0 0.0
    %452 = vmatprep.subr.mxu0 0.0
    %453 = vmatpush1.msra.mxu0 0.0
    %454 = vmatprep.subr.mxu0 0.0
    %455 = vmatpush1.msra.mxu0 0.0
    %456 = vmatprep.subr.mxu0 0.0
    %457 = vmatpush1.msra.mxu0 0.0
    %458 = vmatprep.subr.mxu0 0.0
    %459 = vmatpush1.msra.mxu0 0.0
    %460 = vmatprep.subr.mxu0 0.0
    %461 = vmatpush1.msra.mxu0 0.0
    %462 = vmatprep.subr.mxu0 0.0
    %463 = vmatpush1.msra.mxu0 0.0
    %464 = vmatprep.subr.mxu0 0.0
    %465 = vmatpush1.msra.mxu0 0.0
    %466 = vmatprep.subr.mxu0 0.0
    %467 = vmatpush1.msra.mxu0 0.0
    %468 = vmatprep.subr.mxu0 0.0
    %469 = vmatpush1.msra.mxu0 0.0
    %470 = vmatprep.subr.mxu0 0.0
    %471 = vmatpush1.msra.mxu0 0.0
    %472 = vmatprep.subr.mxu0 0.0
    %473 = vmatpush1.msra.mxu0 0.0
    %474 = vmatprep.subr.mxu0 0.0
    %475 = vmatpush1.msra.mxu0 0.0
    %476 = vmatprep.subr.mxu0 0.0
    %477 = vmatpush1.msra.mxu0 0.0
    %478 = vmatprep.subr.mxu0 0.0
    %479 = vmatpush1.msra.mxu0 0.0
    %480 = vmatprep.subr.mxu0 0.0
    %481 = vmatpush1.msra.mxu0 %v449
    %482 = vmatprep.subr.mxu0 0.0
    %483 = vmatpush2.msra.mxu0 0.0
    %484 = vmatprep.subr.mxu0 0.0
    %485 = vmatpush2.msra.mxu0 0.0
    %486 = vmatprep.subr.mxu0 0.0
    %487 = vmatpush2.msra.mxu0 0.0
    %488 = vmatprep.subr.mxu0 0.0
    %489 = vmatpush2.msra.mxu0 0.0
    %490 = vmatprep.subr.mxu0 0.0
    %491 = vmatpush2.msra.mxu0 0.0
    %492 = vmatprep.subr.mxu0 0.0
    %493 = vmatpush2.msra.mxu0 0.0
    %494 = vmatprep.subr.mxu0 0.0
    %495 = vmatpush2.msra.mxu0 0.0
    %496 = vmatprep.subr.mxu0 0.0
    %497 = vmatpush2.msra.mxu0 0.0
    %498 = vmatprep.subr.mxu0 0.0
    %499 = vmatpush2.msra.mxu0 0.0
    %500 = vmatprep.subr.mxu0 0.0
    %501 = vmatpush2.msra.mxu0 0.0
    %502 = vmatprep.subr.mxu0 0.0
    %503 = vmatpush2.msra.mxu0 0.0
    %504 = vmatprep.subr.mxu0 0.0
    %505 = vmatpush2.msra.mxu0 0.0
    %506 = vmatprep.subr.mxu0 0.0
    %507 = vmatpush2.msra.mxu0 0.0
    %508 = vmatprep.subr.mxu0 0.0
    %509 = vmatpush2.msra.mxu0 0.0
    %510 = vmatprep.subr.mxu0 0.0
    %511 = vmatpush2.msra.mxu0 0.0
    %512 = vmatprep.subr.mxu0 0.0
    %513 = vmatpush2.msra.mxu0 0.0
    %514 = vmatprep.mubr.f32.mxu0 0.0
    %515 = vmatmul.mubr.f32.gmra.mxu0 %v229
    %v516 = vpop.f32.mrf.mxu0
    %v517 = vadd.f32 0.0, %v516
    %v518 = vpop.f32.mrf.mxu0
    %519 = vdwg.mxu0
    %v521 = vsel %vm133, %v517, 0
    %523 = vmatprep.subr.mxu0 0.0
    %524 = vmatpush1.msra.mxu0 0.0
    %525 = vmatprep.subr.mxu0 0.0
    %526 = vmatpush1.msra.mxu0 0.0
    %527 = vmatprep.subr.mxu0 0.0
    %528 = vmatpush1.msra.mxu0 0.0
    %529 = vmatprep.subr.mxu0 0.0
    %530 = vmatpush1.msra.mxu0 0.0
    %531 = vmatprep.subr.mxu0 0.0
    %532 = vmatpush1.msra.mxu0 0.0
    %533 = vmatprep.subr.mxu0 0.0
    %534 = vmatpush1.msra.mxu0 0.0
    %535 = vmatprep.subr.mxu0 0.0
    %536 = vmatpush1.msra.mxu0 0.0
    %537 = vmatprep.subr.mxu0 0.0
    %538 = vmatpush1.msra.mxu0 0.0
    %539 = vmatprep.subr.mxu0 0.0
    %540 = vmatpush1.msra.mxu0 %v218
    %541 = vmatprep.subr.mxu0 0.0
    %542 = vmatpush1.msra.mxu0 %v217
    %543 = vmatprep.subr.mxu0 0.0
    %544 = vmatpush1.msra.mxu0 %v216
    %545 = vmatprep.subr.mxu0 0.0
    %546 = vmatpush1.msra.mxu0 %v215
    %547 = vmatprep.subr.mxu0 0.0
    %548 = vmatpush1.msra.mxu0 %v214
    %549 = vmatprep.subr.mxu0 0.0
    %550 = vmatpush1.msra.mxu0 %v213
    %551 = vmatprep.subr.mxu0 0.0
    %552 = vmatpush1.msra.mxu0 %v212
    %553 = vmatprep.subr.mxu0 0.0
    %554 = vmatpush1.msra.mxu0 %v211
    %555 = vmatprep.subr.mxu0 0.0
    %556 = vmatpush2.msra.mxu0 0.0
    %557 = vmatprep.subr.mxu0 0.0
    %558 = vmatpush2.msra.mxu0 0.0
    %559 = vmatprep.subr.mxu0 0.0
    %560 = vmatpush2.msra.mxu0 0.0
    %561 = vmatprep.subr.mxu0 0.0
    %562 = vmatpush2.msra.mxu0 0.0
    %563 = vmatprep.subr.mxu0 0.0
    %564 = vmatpush2.msra.mxu0 0.0
    %565 = vmatprep.subr.mxu0 0.0
    %566 = vmatpush2.msra.mxu0 0.0
    %567 = vmatprep.subr.mxu0 0.0
    %568 = vmatpush2.msra.mxu0 0.0
    %569 = vmatprep.subr.mxu0 0.0
    %570 = vmatpush2.msra.mxu0 0.0
    %571 = vmatprep.subr.mxu0 0.0
    %572 = vmatpush2.msra.mxu0 0.0
    %573 = vmatprep.subr.mxu0 0.0
    %574 = vmatpush2.msra.mxu0 0.0
    %575 = vmatprep.subr.mxu0 0.0
    %576 = vmatpush2.msra.mxu0 0.0
    %577 = vmatprep.subr.mxu0 0.0
    %578 = vmatpush2.msra.mxu0 0.0
    %579 = vmatprep.subr.mxu0 0.0
    %580 = vmatpush2.msra.mxu0 0.0
    %581 = vmatprep.subr.mxu0 0.0
    %582 = vmatpush2.msra.mxu0 0.0
    %583 = vmatprep.subr.mxu0 0.0
    %584 = vmatpush2.msra.mxu0 0.0
    %585 = vmatprep.subr.mxu0 0.0
    %586 = vmatpush2.msra.mxu0 0.0
    %587 = vmatprep.mubr.f32.mxu0 0.0
    %588 = vmatmul.mubr.f32.gmra.mxu0 %v521
    %v589 = vpop.f32.mrf.mxu0
    %v590 = vadd.f32 %v210, %v589
    %v591 = vpop.f32.mrf.mxu0
    %592 = vdwg.mxu0
    %v593 = vmax.f32 %v590, 0.0
    %v595 = vsel %vm133, %v593, 0
    %597 = vmatprep.subr.mxu0 0.0
    %598 = vmatpush1.msra.mxu0 0.0
    %599 = vmatprep.subr.mxu0 0.0
    %600 = vmatpush1.msra.mxu0 0.0
    %601 = vmatprep.subr.mxu0 0.0
    %602 = vmatpush1.msra.mxu0 0.0
    %603 = vmatprep.subr.mxu0 0.0
    %604 = vmatpush1.msra.mxu0 0.0
    %605 = vmatprep.subr.mxu0 0.0
    %606 = vmatpush1.msra.mxu0 0.0
    %607 = vmatprep.subr.mxu0 0.0
    %608 = vmatpush1.msra.mxu0 0.0
    %609 = vmatprep.subr.mxu0 0.0
    %610 = vmatpush1.msra.mxu0 0.0
    %611 = vmatprep.subr.mxu0 0.0
    %612 = vmatpush1.msra.mxu0 0.0
    %613 = vmatprep.subr.mxu0 0.0
    %614 = vmatpush1.msra.mxu0 %v226
    %615 = vmatprep.subr.mxu0 0.0
    %616 = vmatpush1.msra.mxu0 %v225
    %617 = vmatprep.subr.mxu0 0.0
    %618 = vmatpush1.msra.mxu0 %v224
    %619 = vmatprep.subr.mxu0 0.0
    %620 = vmatpush1.msra.mxu0 %v223
    %621 = vmatprep.subr.mxu0 0.0
    %622 = vmatpush1.msra.mxu0 %v222
    %623 = vmatprep.subr.mxu0 0.0
    %624 = vmatpush1.msra.mxu0 %v221
    %625 = vmatprep.subr.mxu0 0.0
    %626 = vmatpush1.msra.mxu0 %v220
    %627 = vmatprep.subr.mxu0 0.0
    %628 = vmatpush1.msra.mxu0 %v219
    %629 = vmatprep.subr.mxu0 0.0
    %630 = vmatpush2.msra.mxu0 0.0
    %631 = vmatprep.subr.mxu0 0.0
    %632 = vmatpush2.msra.mxu0 0.0
    %633 = vmatprep.subr.mxu0 0.0
    %634 = vmatpush2.msra.mxu0 0.0
    %635 = vmatprep.subr.mxu0 0.0
    %636 = vmatpush2.msra.mxu0 0.0
    %637 = vmatprep.subr.mxu0 0.0
    %638 = vmatpush2.msra.mxu0 0.0
    %639 = vmatprep.subr.mxu0 0.0
    %640 = vmatpush2.msra.mxu0 0.0
    %641 = vmatprep.subr.mxu0 0.0
    %642 = vmatpush2.msra.mxu0 0.0
    %643 = vmatprep.subr.mxu0 0.0
    %644 = vmatpush2.msra.mxu0 0.0
    %645 = vmatprep.subr.mxu0 0.0
    %646 = vmatpush2.msra.mxu0 0.0
    %647 = vmatprep.subr.mxu0 0.0
    %648 = vmatpush2.msra.mxu0 0.0
    %649 = vmatprep.subr.mxu0 0.0
    %650 = vmatpush2.msra.mxu0 0.0
    %651 = vmatprep.subr.mxu0 0.0
    %652 = vmatpush2.msra.mxu0 0.0
    %653 = vmatprep.subr.mxu0 0.0
    %654 = vmatpush2.msra.mxu0 0.0
    %655 = vmatprep.subr.mxu0 0.0
    %656 = vmatpush2.msra.mxu0 0.0
    %657 = vmatprep.subr.mxu0 0.0
    %658 = vmatpush2.msra.mxu0 0.0
    %659 = vmatprep.subr.mxu0 0.0
    %660 = vmatpush2.msra.mxu0 0.0
    %661 = vmatprep.mubr.f32.mxu0 0.0
    %662 = vmatmul.mubr.f32.gmra.mxu0 %v595
    %v663 = vpop.f32.mrf.mxu0
    %v664 = vadd.f32 0.0, %v663
    %v665 = vpop.f32.mrf.mxu0
    %666 = vdwg.mxu0
    %v667 = vadd.f32 %v204, %v664
    %v668 = vmax.f32 %v667, 0.0
    %669 = vmatprep.subr.mxu0 0.0
    %670 = vmatpush1.msra.mxu0 0.0
    %671 = vmatprep.subr.mxu0 0.0
    %672 = vmatpush1.msra.mxu0 0.0
    %673 = vmatprep.subr.mxu0 0.0
    %674 = vmatpush1.msra.mxu0 0.0
    %675 = vmatprep.subr.mxu0 0.0
    %676 = vmatpush1.msra.mxu0 0.0
    %677 = vmatprep.subr.mxu0 0.0
    %678 = vmatpush1.msra.mxu0 0.0
    %679 = vmatprep.subr.mxu0 0.0
    %680 = vmatpush1.msra.mxu0 0.0
    %681 = vmatprep.subr.mxu0 0.0
    %682 = vmatpush1.msra.mxu0 0.0
    %683 = vmatprep.subr.mxu0 0.0
    %684 = vmatpush1.msra.mxu0 0.0
    %685 = vmatprep.subr.mxu0 0.0
    %686 = vmatpush1.msra.mxu0 0.0
    %687 = vmatprep.subr.mxu0 0.0
    %688 = vmatpush1.msra.mxu0 0.0
    %689 = vmatprep.subr.mxu0 0.0
    %690 = vmatpush1.msra.mxu0 0.0
    %691 = vmatprep.subr.mxu0 0.0
    %692 = vmatpush1.msra.mxu0 0.0
    %693 = vmatprep.subr.mxu0 0.0
    %694 = vmatpush1.msra.mxu0 0.0
    %695 = vmatprep.subr.mxu0 0.0
    %696 = vmatpush1.msra.mxu0 0.0
    %697 = vmatprep.subr.mxu0 0.0
    %698 = vmatpush1.msra.mxu0 0.0
    %699 = vmatprep.subr.mxu0 0.0
    %700 = vmatpush1.msra.mxu0 %v668
    %701 = vmatprep.subr.mxu0 0.0
    %702 = vmatpush2.msra.mxu0 0.0
    %703 = vmatprep.subr.mxu0 0.0
    %704 = vmatpush2.msra.mxu0 0.0
    %705 = vmatprep.subr.mxu0 0.0
    %706 = vmatpush2.msra.mxu0 0.0
    %707 = vmatprep.subr.mxu0 0.0
    %708 = vmatpush2.msra.mxu0 0.0
    %709 = vmatprep.subr.mxu0 0.0
    %710 = vmatpush2.msra.mxu0 0.0
    %711 = vmatprep.subr.mxu0 0.0
    %712 = vmatpush2.msra.mxu0 0.0
    %713 = vmatprep.subr.mxu0 0.0
    %714 = vmatpush2.msra.mxu0 0.0
    %715 = vmatprep.subr.mxu0 0.0
    %716 = vmatpush2.msra.mxu0 0.0
    %717 = vmatprep.subr.mxu0 0.0
    %718 = vmatpush2.msra.mxu0 0.0
    %719 = vmatprep.subr.mxu0 0.0
    %720 = vmatpush2.msra.mxu0 0.0
    %721 = vmatprep.subr.mxu0 0.0
    %722 = vmatpush2.msra.mxu0 0.0
    %723 = vmatprep.subr.mxu0 0.0
    %724 = vmatpush2.msra.mxu0 0.0
    %725 = vmatprep.subr.mxu0 0.0
    %726 = vmatpush2.msra.mxu0 0.0
    %727 = vmatprep.subr.mxu0 0.0
    %728 = vmatpush2.msra.mxu0 0.0
    %729 = vmatprep.subr.mxu0 0.0
    %730 = vmatpush2.msra.mxu0 0.0
    %731 = vmatprep.subr.mxu0 0.0
    %732 = vmatpush2.msra.mxu0 0.0
    %733 = vmatprep.mubr.f32.mxu0 0.0
    %734 = vmatmul.mubr.f32.gmra.mxu0 %v229
    %v735 = vpop.f32.mrf.mxu0
    %v736 = vadd.f32 0.0, %v735
    %v737 = vpop.f32.mrf.mxu0
    %738 = vdwg.mxu0
    %v740 = vsel %vm133, %v736, 0
    %742 = vmatprep.subr.mxu0 0.0
    %743 = vmatpush1.msra.mxu0 0.0
    %744 = vmatprep.subr.mxu0 0.0
    %745 = vmatpush1.msra.mxu0 0.0
    %746 = vmatprep.subr.mxu0 0.0
    %747 = vmatpush1.msra.mxu0 0.0
    %748 = vmatprep.subr.mxu0 0.0
    %749 = vmatpush1.msra.mxu0 0.0
    %750 = vmatprep.subr.mxu0 0.0
    %751 = vmatpush1.msra.mxu0 0.0
    %752 = vmatprep.subr.mxu0 0.0
    %753 = vmatpush1.msra.mxu0 0.0
    %754 = vmatprep.subr.mxu0 0.0
    %755 = vmatpush1.msra.mxu0 0.0
    %756 = vmatprep.subr.mxu0 0.0
    %757 = vmatpush1.msra.mxu0 0.0
    %758 = vmatprep.subr.mxu0 0.0
    %759 = vmatpush1.msra.mxu0 %v218
    %760 = vmatprep.subr.mxu0 0.0
    %761 = vmatpush1.msra.mxu0 %v217
    %762 = vmatprep.subr.mxu0 0.0
    %763 = vmatpush1.msra.mxu0 %v216
    %764 = vmatprep.subr.mxu0 0.0
    %765 = vmatpush1.msra.mxu0 %v215
    %766 = vmatprep.subr.mxu0 0.0
    %767 = vmatpush1.msra.mxu0 %v214
    %768 = vmatprep.subr.mxu0 0.0
    %769 = vmatpush1.msra.mxu0 %v213
    %770 = vmatprep.subr.mxu0 0.0
    %771 = vmatpush1.msra.mxu0 %v212
    %772 = vmatprep.subr.mxu0 0.0
    %773 = vmatpush1.msra.mxu0 %v211
    %774 = vmatprep.subr.mxu0 0.0
    %775 = vmatpush2.msra.mxu0 0.0
    %776 = vmatprep.subr.mxu0 0.0
    %777 = vmatpush2.msra.mxu0 0.0
    %778 = vmatprep.subr.mxu0 0.0
    %779 = vmatpush2.msra.mxu0 0.0
    %780 = vmatprep.subr.mxu0 0.0
    %781 = vmatpush2.msra.mxu0 0.0
    %782 = vmatprep.subr.mxu0 0.0
    %783 = vmatpush2.msra.mxu0 0.0
    %784 = vmatprep.subr.mxu0 0.0
    %785 = vmatpush2.msra.mxu0 0.0
    %786 = vmatprep.subr.mxu0 0.0
    %787 = vmatpush2.msra.mxu0 0.0
    %788 = vmatprep.subr.mxu0 0.0
    %789 = vmatpush2.msra.mxu0 0.0
    %790 = vmatprep.subr.mxu0 0.0
    %791 = vmatpush2.msra.mxu0 0.0
    %792 = vmatprep.subr.mxu0 0.0
    %793 = vmatpush2.msra.mxu0 0.0
    %794 = vmatprep.subr.mxu0 0.0
    %795 = vmatpush2.msra.mxu0 0.0
    %796 = vmatprep.subr.mxu0 0.0
    %797 = vmatpush2.msra.mxu0 0.0
    %798 = vmatprep.subr.mxu0 0.0
    %799 = vmatpush2.msra.mxu0 0.0
    %800 = vmatprep.subr.mxu0 0.0
    %801 = vmatpush2.msra.mxu0 0.0
    %802 = vmatprep.subr.mxu0 0.0
    %803 = vmatpush2.msra.mxu0 0.0
    %804 = vmatprep.subr.mxu0 0.0
    %805 = vmatpush2.msra.mxu0 0.0
    %806 = vmatprep.mubr.f32.mxu0 0.0
    %807 = vmatmul.mubr.f32.gmra.mxu0 %v740
    %v808 = vpop.f32.mrf.mxu0
    %v809 = vadd.f32 %v210, %v808
    %v810 = vpop.f32.mrf.mxu0
    %811 = vdwg.mxu0
    %v812 = vmax.f32 %v809, 0.0
    %v814 = vsel %vm133, %v812, 0
    %816 = vmatprep.subr.mxu0 0.0
    %817 = vmatpush1.msra.mxu0 0.0
    %818 = vmatprep.subr.mxu0 0.0
    %819 = vmatpush1.msra.mxu0 0.0
    %820 = vmatprep.subr.mxu0 0.0
    %821 = vmatpush1.msra.mxu0 0.0
    %822 = vmatprep.subr.mxu0 0.0
    %823 = vmatpush1.msra.mxu0 0.0
    %824 = vmatprep.subr.mxu0 0.0
    %825 = vmatpush1.msra.mxu0 0.0
    %826 = vmatprep.subr.mxu0 0.0
    %827 = vmatpush1.msra.mxu0 0.0
    %828 = vmatprep.subr.mxu0 0.0
    %829 = vmatpush1.msra.mxu0 0.0
    %830 = vmatprep.subr.mxu0 0.0
    %831 = vmatpush1.msra.mxu0 0.0
    %832 = vmatprep.subr.mxu0 0.0
    %833 = vmatpush1.msra.mxu0 %v226
    %834 = vmatprep.subr.mxu0 0.0
    %835 = vmatpush1.msra.mxu0 %v225
    %836 = vmatprep.subr.mxu0 0.0
    %837 = vmatpush1.msra.mxu0 %v224
    %838 = vmatprep.subr.mxu0 0.0
    %839 = vmatpush1.msra.mxu0 %v223
    %840 = vmatprep.subr.mxu0 0.0
    %841 = vmatpush1.msra.mxu0 %v222
    %842 = vmatprep.subr.mxu0 0.0
    %843 = vmatpush1.msra.mxu0 %v221
    %844 = vmatprep.subr.mxu0 0.0
    %845 = vmatpush1.msra.mxu0 %v220
    %846 = vmatprep.subr.mxu0 0.0
    %847 = vmatpush1.msra.mxu0 %v219
    %848 = vmatprep.subr.mxu0 0.0
    %849 = vmatpush2.msra.mxu0 0.0
    %850 = vmatprep.subr.mxu0 0.0
    %851 = vmatpush2.msra.mxu0 0.0
    %852 = vmatprep.subr.mxu0 0.0
    %853 = vmatpush2.msra.mxu0 0.0
    %854 = vmatprep.subr.mxu0 0.0
    %855 = vmatpush2.msra.mxu0 0.0
    %856 = vmatprep.subr.mxu0 0.0
    %857 = vmatpush2.msra.mxu0 0.0
    %858 = vmatprep.subr.mxu0 0.0
    %859 = vmatpush2.msra.mxu0 0.0
    %860 = vmatprep.subr.mxu0 0.0
    %861 = vmatpush2.msra.mxu0 0.0
    %862 = vmatprep.subr.mxu0 0.0
    %863 = vmatpush2.msra.mxu0 0.0
    %864 = vmatprep.subr.mxu0 0.0
    %865 = vmatpush2.msra.mxu0 0.0
    %866 = vmatprep.subr.mxu0 0.0
    %867 = vmatpush2.msra.mxu0 0.0
    %868 = vmatprep.subr.mxu0 0.0
    %869 = vmatpush2.msra.mxu0 0.0
    %870 = vmatprep.subr.mxu0 0.0
    %871 = vmatpush2.msra.mxu0 0.0
    %872 = vmatprep.subr.mxu0 0.0
    %873 = vmatpush2.msra.mxu0 0.0
    %874 = vmatprep.subr.mxu0 0.0
    %875 = vmatpush2.msra.mxu0 0.0
    %876 = vmatprep.subr.mxu0 0.0
    %877 = vmatpush2.msra.mxu0 0.0
    %878 = vmatprep.subr.mxu0 0.0
    %879 = vmatpush2.msra.mxu0 0.0
    %880 = vmatprep.mubr.f32.mxu0 0.0
    %881 = vmatmul.mubr.f32.gmra.mxu0 %v814
    %v882 = vpop.f32.mrf.mxu0
    %v883 = vadd.f32 0.0, %v882
    %v884 = vpop.f32.mrf.mxu0
    %885 = vdwg.mxu0
    %v886 = vadd.f32 %v204, %v883
    %v887 = vmax.f32 %v886, 0.0
    %v888 = vsel %vm133, %v887, 0.0
    %v889 = vrot.slane %v888, 4
    %v890 = vadd.f32 %v888, %v889
    %v891 = vrot.slane %v890, 2
    %v892 = vadd.f32 %v890, %v891
    %v893 = vrot.slane %v892, 1
    %v894 = vadd.f32 %v892, %v893
    %v895 = vrcp.pop 8.0
    %v896 = vmul.f32 %v894, %v895
    %v897 = vld [vmem:[%s2 + $0xd0] sm:$0xff]
    %v898 = vld [vmem:[%s2 + $0xd8] sm:$0xff]
    %v899 = vld [vmem:[%s2 + $0xe0] sm:$0xff]
    %v900 = vld [vmem:[%s2 + $0xe8] sm:$0xff]
    %v901 = vld [vmem:[%s2 + $0xf0] sm:$0xff]
    %v902 = vld [vmem:[%s2 + $0xf8] sm:$0xff]
    %v903 = vld [vmem:[%s2 + $0x100] sm:$0xff]
    %v904 = vld [vmem:[%s2 + $0x108] sm:$0xff]
    %v906 = vsel %vm133, %v896, 0
    %908 = vmatprep.subr.mxu0 0.0
    %909 = vmatpush1.msra.mxu0 0.0
    %910 = vmatprep.subr.mxu0 0.0
    %911 = vmatpush1.msra.mxu0 0.0
    %912 = vmatprep.subr.mxu0 0.0
    %913 = vmatpush1.msra.mxu0 0.0
    %914 = vmatprep.subr.mxu0 0.0
    %915 = vmatpush1.msra.mxu0 0.0
    %916 = vmatprep.subr.mxu0 0.0
    %917 = vmatpush1.msra.mxu0 0.0
    %918 = vmatprep.subr.mxu0 0.0
    %919 = vmatpush1.msra.mxu0 0.0
    %920 = vmatprep.subr.mxu0 0.0
    %921 = vmatpush1.msra.mxu0 0.0
    %922 = vmatprep.subr.mxu0 0.0
    %923 = vmatpush1.msra.mxu0 0.0
    %924 = vmatprep.subr.mxu0 0.0
    %925 = vmatpush1.msra.mxu0 %v904
    %926 = vmatprep.subr.mxu0 0.0
    %927 = vmatpush1.msra.mxu0 %v903
    %928 = vmatprep.subr.mxu0 0.0
    %929 = vmatpush1.msra.mxu0 %v902
    %930 = vmatprep.subr.mxu0 0.0
    %931 = vmatpush1.msra.mxu0 %v901
    %932 = vmatprep.subr.mxu0 0.0
    %933 = vmatpush1.msra.mxu0 %v900
    %934 = vmatprep.subr.mxu0 0.0
    %935 = vmatpush1.msra.mxu0 %v899
    %936 = vmatprep.subr.mxu0 0.0
    %937 = vmatpush1.msra.mxu0 %v898
    %938 = vmatprep.subr.mxu0 0.0
    %939 = vmatpush1.msra.mxu0 %v897
    %940 = vmatprep.subr.mxu0 0.0
    %941 = vmatpush2.msra.mxu0 0.0
    %942 = vmatprep.subr.mxu0 0.0
    %943 = vmatpush2.msra.mxu0 0.0
    %944 = vmatprep.subr.mxu0 0.0
    %945 = vmatpush2.msra.mxu0 0.0
    %946 = vmatprep.subr.mxu0 0.0
    %947 = vmatpush2.msra.mxu0 0.0
    %948 = vmatprep.subr.mxu0 0.0
    %949 = vmatpush2.msra.mxu0 0.0
    %950 = vmatprep.subr.mxu0 0.0
    %951 = vmatpush2.msra.mxu0 0.0
    %952 = vmatprep.subr.mxu0 0.0
    %953 = vmatpush2.msra.mxu0 0.0
    %954 = vmatprep.subr.mxu0 0.0
    %955 = vmatpush2.msra.mxu0 0.0
    %956 = vmatprep.subr.mxu0 0.0
    %957 = vmatpush2.msra.mxu0 0.0
    %958 = vmatprep.subr.mxu0 0.0
    %959 = vmatpush2.msra.mxu0 0.0
    %960 = vmatprep.subr.mxu0 0.0
    %961 = vmatpush2.msra.mxu0 0.0
    %962 = vmatprep.subr.mxu0 0.0
    %963 = vmatpush2.msra.mxu0 0.0
    %964 = vmatprep.subr.mxu0 0.0
    %965 = vmatpush2.msra.mxu0 0.0
    %966 = vmatprep.subr.mxu0 0.0
    %967 = vmatpush2.msra.mxu0 0.0
    %968 = vmatprep.subr.mxu0 0.0
    %969 = vmatpush2.msra.mxu0 0.0
    %970 = vmatprep.subr.mxu0 0.0
    %971 = vmatpush2.msra.mxu0 0.0
    %972 = vmatprep.mubr.f32.mxu0 0.0
    %973 = vmatmul.mubr.f32.gmra.mxu0 %v906
    %v974 = vpop.f32.mrf.mxu0
    %v975 = vadd.f32 0.0, %v974
    %v976 = vpop.f32.mrf.mxu0
    %977 = vdwg.mxu0
    %v978 = vsel %vm133, %v975, 0.0
    %v979 = vlaneseq
    %v980 = vand.u32 %v979, 127
    %v981 = vadd.s32 %v980, 128
    %vm982 = vcmp.lt.s32.totalorder %v980, 128
    %vm983 = vcmp.lt.s32.totalorder %v981, 128
    %s984 = sld [smem:[#allocation2]]
    %vm985 = vcmp.lt.s32.totalorder %v980, 192
    %vm986 = vcmp.lt.s32.totalorder %v981, 192
    %s987 = sld [smem:[#allocation2 + $0x1]]
    %s988 = sld [smem:[#allocation2 + $0x2]]
    %v989 = vstv %s987
    %v990 = vstv %s988
    %v991 = vsel %vm985, %v989, %v990
    %v992 = vsel %vm986, %v989, %v990
    %v993 = vstv %s984
    %v994 = vsel %vm982, %v993, %v991
    %v995 = vsel %vm983, %v993, %v992
    %v996 = vld [vmem:[%s3] ss:$2 sm:$0x3]
    %s997 = scalar_lea.vmem %s3, 1
    %v998 = vld [vmem:[%s997] ss:$2 sm:$0x3]
    %v1000 = vlaneseq
    %v1001 = vshrl.u32 %v1000, 7
    %v1002 = vsub.s32 0, %v1001
    %v1003 = vrot.slane %v996, %v1002
    %v1004 = vlaneseq
    %v1005 = vshrl.u32 %v1004, 7
    %v1006 = vsub.s32 1, %v1005
    %v1007 = vrot.slane %v996, %v1006
    %v1010 = vmul.f32 %v994, %v1003
    %v1011 = vmul.f32 %v995, %v1007
    %v1012 = vadd.f32 %v978, %v1010
    %v1013 = vadd.f32 %v1011, 0.0
    %v1015 = vlaneseq
    %v1016 = vshrl.u32 %v1015, 7
    %v1017 = vsub.s32 0, %v1016
    %v1018 = vrot.slane %v998, %v1017
    %v1019 = vlaneseq
    %v1020 = vshrl.u32 %v1019, 7
    %v1021 = vsub.s32 1, %v1020
    %v1022 = vrot.slane %v998, %v1021
    %v1025 = vadd.f32 %v1012, %v1018
    %v1026 = vadd.f32 %v1013, %v1022
    %v1027 = vmax.f32 %v1025, 0.0
    %v1028 = vmax.f32 %v1026, 0.0
    %v1029 = vld [vmem:[%s2 + $0x110] sm:$0xff]
    %v1030 = vld [vmem:[%s2 + $0x118] sm:$0xff]
    %v1031 = vld [vmem:[%s2 + $0x120] sm:$0xff]
    %v1032 = vld [vmem:[%s2 + $0x128] sm:$0xff]
    %v1033 = vld [vmem:[%s2 + $0x130] sm:$0xff]
    %v1034 = vld [vmem:[%s2 + $0x138] sm:$0xff]
    %v1035 = vld [vmem:[%s2 + $0x140] sm:$0xff]
    %v1036 = vld [vmem:[%s2 + $0x148] sm:$0xff]
    %v1037 = vld [vmem:[%s2 + $0x150] sm:$0xff]
    %v1038 = vld [vmem:[%s2 + $0x158] sm:$0xff]
    %v1039 = vld [vmem:[%s2 + $0x160] sm:$0xff]
    %v1040 = vld [vmem:[%s2 + $0x168] sm:$0xff]
    %v1041 = vld [vmem:[%s2 + $0x170] sm:$0xff]
    %v1042 = vld [vmem:[%s2 + $0x178] sm:$0xff]
    %v1043 = vld [vmem:[%s2 + $0x180] sm:$0xff]
    %v1044 = vld [vmem:[%s2 + $0x188] sm:$0xff]
    %v1045 = vld [vmem:[%s2 + $0x190] sm:$0xff]
    %v1046 = vld [vmem:[%s2 + $0x198] sm:$0xff]
    %v1047 = vld [vmem:[%s2 + $0x1a0] sm:$0xff]
    %v1048 = vld [vmem:[%s2 + $0x1a8] sm:$0xff]
    %v1049 = vld [vmem:[%s2 + $0x1b0] sm:$0xff]
    %v1050 = vld [vmem:[%s2 + $0x1b8] sm:$0xff]
    %v1051 = vld [vmem:[%s2 + $0x1c0] sm:$0xff]
    %v1052 = vld [vmem:[%s2 + $0x1c8] sm:$0xff]
    %v1053 = vld [vmem:[%s2 + $0x1d0] sm:$0xff]
    %v1054 = vld [vmem:[%s2 + $0x1d8] sm:$0xff]
    %v1055 = vld [vmem:[%s2 + $0x1e0] sm:$0xff]
    %v1056 = vld [vmem:[%s2 + $0x1e8] sm:$0xff]
    %v1057 = vld [vmem:[%s2 + $0x1f0] sm:$0xff]
    %v1058 = vld [vmem:[%s2 + $0x1f8] sm:$0xff]
    %v1059 = vld [vmem:[%s2 + $0x200] sm:$0xff]
    %v1060 = vld [vmem:[%s2 + $0x208] sm:$0xff]
    %1061 = vmatprep.subr.mxu0 0.0
    %1062 = vmatpush1.msra.mxu0 %v1044
    %1063 = vmatprep.subr.mxu0 0.0
    %1064 = vmatpush1.msra.mxu0 %v1043
    %1065 = vmatprep.subr.mxu0 0.0
    %1066 = vmatpush1.msra.mxu0 %v1042
    %1067 = vmatprep.subr.mxu0 0.0
    %1068 = vmatpush1.msra.mxu0 %v1041
    %1069 = vmatprep.subr.mxu0 0.0
    %1070 = vmatpush1.msra.mxu0 %v1040
    %1071 = vmatprep.subr.mxu0 0.0
    %1072 = vmatpush1.msra.mxu0 %v1039
    %1073 = vmatprep.subr.mxu0 0.0
    %1074 = vmatpush1.msra.mxu0 %v1038
    %1075 = vmatprep.subr.mxu0 0.0
    %1076 = vmatpush1.msra.mxu0 %v1037
    %1077 = vmatprep.subr.mxu0 0.0
    %1078 = vmatpush1.msra.mxu0 %v1036
    %1079 = vmatprep.subr.mxu0 0.0
    %1080 = vmatpush1.msra.mxu0 %v1035
    %1081 = vmatprep.subr.mxu0 0.0
    %1082 = vmatpush1.msra.mxu0 %v1034
    %1083 = vmatprep.subr.mxu0 0.0
    %1084 = vmatpush1.msra.mxu0 %v1033
    %1085 = vmatprep.subr.mxu0 0.0
    %1086 = vmatpush1.msra.mxu0 %v1032
    %1087 = vmatprep.subr.mxu0 0.0
    %1088 = vmatpush1.msra.mxu0 %v1031
    %1089 = vmatprep.subr.mxu0 0.0
    %1090 = vmatpush1.msra.mxu0 %v1030
    %1091 = vmatprep.subr.mxu0 0.0
    %1092 = vmatpush1.msra.mxu0 %v1029
    %1093 = vmatprep.subr.mxu0 0.0
    %1094 = vmatpush2.msra.mxu0 %v1060
    %1095 = vmatprep.subr.mxu0 0.0
    %1096 = vmatpush2.msra.mxu0 %v1059
    %1097 = vmatprep.subr.mxu0 0.0
    %1098 = vmatpush2.msra.mxu0 %v1058
    %1099 = vmatprep.subr.mxu0 0.0
    %1100 = vmatpush2.msra.mxu0 %v1057
    %1101 = vmatprep.subr.mxu0 0.0
    %1102 = vmatpush2.msra.mxu0 %v1056
    %1103 = vmatprep.subr.mxu0 0.0
    %1104 = vmatpush2.msra.mxu0 %v1055
    %1105 = vmatprep.subr.mxu0 0.0
    %1106 = vmatpush2.msra.mxu0 %v1054
    %1107 = vmatprep.subr.mxu0 0.0
    %1108 = vmatpush2.msra.mxu0 %v1053
    %1109 = vmatprep.subr.mxu0 0.0
    %1110 = vmatpush2.msra.mxu0 %v1052
    %1111 = vmatprep.subr.mxu0 0.0
    %1112 = vmatpush2.msra.mxu0 %v1051
    %1113 = vmatprep.subr.mxu0 0.0
    %1114 = vmatpush2.msra.mxu0 %v1050
    %1115 = vmatprep.subr.mxu0 0.0
    %1116 = vmatpush2.msra.mxu0 %v1049
    %1117 = vmatprep.subr.mxu0 0.0
    %1118 = vmatpush2.msra.mxu0 %v1048
    %1119 = vmatprep.subr.mxu0 0.0
    %1120 = vmatpush2.msra.mxu0 %v1047
    %1121 = vmatprep.subr.mxu0 0.0
    %1122 = vmatpush2.msra.mxu0 %v1046
    %1123 = vmatprep.subr.mxu0 0.0
    %1124 = vmatpush2.msra.mxu0 %v1045
    %1125 = vmatprep.mubr.f32.mxu0 %v1028
    %1126 = vmatmul.mubr.f32.gmra.mxu0 %v1027
    %v1127 = vpop.f32.mrf.mxu0
    %v1128 = vadd.f32 %v36, %v1127
    %v1129 = vpop.f32.mrf.mxu0
    %1130 = vdwg.mxu0
    %v1131 = vmax.f32 %v1128, 0.0
    %v1132 = vld [vmem:[%s2 + $0x210] sm:$0xff]
    %v1133 = vld [vmem:[%s2 + $0x218] sm:$0xff]
    %v1134 = vld [vmem:[%s2 + $0x220] sm:$0xff]
    %v1135 = vld [vmem:[%s2 + $0x228] sm:$0xff]
    %v1136 = vld [vmem:[%s2 + $0x230] sm:$0xff]
    %v1137 = vld [vmem:[%s2 + $0x238] sm:$0xff]
    %v1138 = vld [vmem:[%s2 + $0x240] sm:$0xff]
    %v1139 = vld [vmem:[%s2 + $0x248] sm:$0xff]
    %v1141 = vsel %vm133, %v1131, 0
    %1143 = vmatprep.subr.mxu0 0.0
    %1144 = vmatpush1.msra.mxu0 0.0
    %1145 = vmatprep.subr.mxu0 0.0
    %1146 = vmatpush1.msra.mxu0 0.0
    %1147 = vmatprep.subr.mxu0 0.0
    %1148 = vmatpush1.msra.mxu0 0.0
    %1149 = vmatprep.subr.mxu0 0.0
    %1150 = vmatpush1.msra.mxu0 0.0
    %1151 = vmatprep.subr.mxu0 0.0
    %1152 = vmatpush1.msra.mxu0 0.0
    %1153 = vmatprep.subr.mxu0 0.0
    %1154 = vmatpush1.msra.mxu0 0.0
    %1155 = vmatprep.subr.mxu0 0.0
    %1156 = vmatpush1.msra.mxu0 0.0
    %1157 = vmatprep.subr.mxu0 0.0
    %1158 = vmatpush1.msra.mxu0 0.0
    %1159 = vmatprep.subr.mxu0 0.0
    %1160 = vmatpush1.msra.mxu0 %v1139
    %1161 = vmatprep.subr.mxu0 0.0
    %1162 = vmatpush1.msra.mxu0 %v1138
    %1163 = vmatprep.subr.mxu0 0.0
    %1164 = vmatpush1.msra.mxu0 %v1137
    %1165 = vmatprep.subr.mxu0 0.0
    %1166 = vmatpush1.msra.mxu0 %v1136
    %1167 = vmatprep.subr.mxu0 0.0
    %1168 = vmatpush1.msra.mxu0 %v1135
    %1169 = vmatprep.subr.mxu0 0.0
    %1170 = vmatpush1.msra.mxu0 %v1134
    %1171 = vmatprep.subr.mxu0 0.0
    %1172 = vmatpush1.msra.mxu0 %v1133
    %1173 = vmatprep.subr.mxu0 0.0
    %1174 = vmatpush1.msra.mxu0 %v1132
    %1175 = vmatprep.subr.mxu0 0.0
    %1176 = vmatpush2.msra.mxu0 0.0
    %1177 = vmatprep.subr.mxu0 0.0
    %1178 = vmatpush2.msra.mxu0 0.0
    %1179 = vmatprep.subr.mxu0 0.0
    %1180 = vmatpush2.msra.mxu0 0.0
    %1181 = vmatprep.subr.mxu0 0.0
    %1182 = vmatpush2.msra.mxu0 0.0
    %1183 = vmatprep.subr.mxu0 0.0
    %1184 = vmatpush2.msra.mxu0 0.0
    %1185 = vmatprep.subr.mxu0 0.0
    %1186 = vmatpush2.msra.mxu0 0.0
    %1187 = vmatprep.subr.mxu0 0.0
    %1188 = vmatpush2.msra.mxu0 0.0
    %1189 = vmatprep.subr.mxu0 0.0
    %1190 = vmatpush2.msra.mxu0 0.0
    %1191 = vmatprep.subr.mxu0 0.0
    %1192 = vmatpush2.msra.mxu0 0.0
    %1193 = vmatprep.subr.mxu0 0.0
    %1194 = vmatpush2.msra.mxu0 0.0
    %1195 = vmatprep.subr.mxu0 0.0
    %1196 = vmatpush2.msra.mxu0 0.0
    %1197 = vmatprep.subr.mxu0 0.0
    %1198 = vmatpush2.msra.mxu0 0.0
    %1199 = vmatprep.subr.mxu0 0.0
    %1200 = vmatpush2.msra.mxu0 0.0
    %1201 = vmatprep.subr.mxu0 0.0
    %1202 = vmatpush2.msra.mxu0 0.0
    %1203 = vmatprep.subr.mxu0 0.0
    %1204 = vmatpush2.msra.mxu0 0.0
    %1205 = vmatprep.subr.mxu0 0.0
    %1206 = vmatpush2.msra.mxu0 0.0
    %1207 = vmatprep.mubr.f32.mxu0 0.0
    %1208 = vmatmul.mubr.f32.gmra.mxu0 %v1141
    %v1209 = vpop.f32.mrf.mxu0
    %v1210 = vadd.f32 %v37, %v1209
    %v1211 = vpop.f32.mrf.mxu0
    %1212 = vdwg.mxu0
    %v1213 = vmax.f32 %v1210, 0.0
    %v1214 = vmul.f32 %v1213, %v38
    %vm1215 = vcmask 516096
    %v1216 = vsel %vm1215, %v1214, 0.0
    %1217 = vadd.xlane.f32.xlu0 %v1216
    %v1218 = vpop.xlane.xlu0 %1217
    %v1219 = vadd.f32 %v1218, %v39
    %vm1220 = vcmask 0
    %1221 = vst.msk [vmem:[#allocation5] sm:$0x1] %vm1220, %v1219
    // Predicated region
    $region22: #{tpu_custom_call.1} parent=1 // pred_check
      _
    $region23: #{tpu_custom_call.1} parent=1 // pred_check_branch
      %1223 = sbr.rel (0) target = $region25
    $region24: #{tpu_custom_call.1} parent=1 // pred_region
      %s1225 = ssub.s32 16, 16
      %1226 = vsyncadd [#allocation3], %s1225
      %s1228 = sshll.u32 [#allocation5], 4
      %s1229 = int_to_ptr.vmem [resolvable:$true] %s1228
      %1231 = dma.vmem_to_hbm [thread:$0]  %s1229, 16, %s4, [#allocation3]
    $region25: #{tpu_custom_call.1} parent=1 // pred_fallthru
      _
    // Predicated region
    $region26: #{tpu_custom_call.1} parent=1 // pred_check
      _
    $region27: #{tpu_custom_call.1} parent=1 // pred_check_branch
      %1233 = sbr.rel (0) target = $region29
    $region28: #{tpu_custom_call.1} parent=1 // pred_region
      %1234 = dma.done [#allocation3], 16
    $region29: #{tpu_custom_call.1} parent=1 // pred_fallthru
      _
    %1235 = vsyncpa [#allocation3], 1
    %1236 = vsyncpa [#allocation4], 1

</llo_original>
